<compile_context>
chip_gen: v7x
topology: tpu7x:2x2x1
jax: 0.10.0
libtpu: 0.0.40
codegen_flags: <defaults>
</compile_context>

<pallas_src>
import functools

import jax
import jax.numpy as jnp
from jax.experimental import pallas as pl
from jax.experimental.pallas import tpu as pltpu

NOISE_SIZE = 10
LATENT_SIZE = 1
INPUT_DIM = NOISE_SIZE + LATENT_SIZE   # 11
HIDDEN = 256
OUTPUT_DIM = 1


def _round_up(x, m):
    return ((x + m - 1) // m) * m


def _generator_kernel(noise_ref, latent_ref,
                      w1n_ref, w1l_ref, b1_ref,
                      w2_ref, b2_ref,
                      w3_ref, b3_ref,
                      w4_ref, b4_ref,
                      o_ref):
    # noise_ref: (TB, 10) f32, latent_ref: (TB, 1) f32.
    # Weights w* are bf16 (in, out); biases are f32 (1, out).
    noise = noise_ref[...].astype(jnp.bfloat16)
    latent = latent_ref[...]                                   # (TB, 1) f32

    # Layer 1: folded concat = noise @ W1[:10] + latent * W1[10:] + b1
    h = jnp.dot(noise, w1n_ref[...], preferred_element_type=jnp.float32)
    h = h + latent * w1l_ref[...]                              # (TB,1)*(1,256) on VPU
    h = jnp.maximum(h + b1_ref[...], 0.0)

    # Layer 2
    h = jnp.dot(h.astype(jnp.bfloat16), w2_ref[...],
                preferred_element_type=jnp.float32)
    h = jnp.maximum(h + b2_ref[...], 0.0)

    # Layer 3
    h = jnp.dot(h.astype(jnp.bfloat16), w3_ref[...],
                preferred_element_type=jnp.float32)
    h = jnp.maximum(h + b3_ref[...], 0.0)

    # Layer 4 (no activation)
    out = jnp.dot(h.astype(jnp.bfloat16), w4_ref[...],
                  preferred_element_type=jnp.float32) + b4_ref[...]
    o_ref[...] = out.astype(o_ref.dtype)


def generator_forward(noise, latent, params, *, tile_b=256):
    """noise: (B, 10) f32, latent: (B, 1) f32 -> (B, 1) f32."""
    B = noise.shape[0]
    w1, b1, w2, b2, w3, b3, w4, b4 = params

    # Split the first-layer weight so the concat never materializes; cast the
    # matmul weights to bf16 (MXU native), keep biases / latent path in f32.
    w1n = w1[:NOISE_SIZE].astype(jnp.bfloat16)     # (10, 256)
    w1l = w1[NOISE_SIZE:].astype(jnp.float32)      # (1, 256)
    w2b = w2.astype(jnp.bfloat16)
    w3b = w3.astype(jnp.bfloat16)
    w4b = w4.astype(jnp.bfloat16)

    # Pick a batch tile: multiple of 8, no larger than the (padded) batch.
    tb = min(_round_up(tile_b, 8), _round_up(B, 8))
    Bp = _round_up(B, tb)
    if Bp != B:
        pad = Bp - B
        noise = jnp.pad(noise, ((0, pad), (0, 0)))
        latent = jnp.pad(latent, ((0, pad), (0, 0)))

    grid = (Bp // tb,)

    # Full-array blocks for weights/biases (resident in VMEM, replicated
    # across the batch grid -> Mosaic skips the re-DMA).
    def rep(shape):
        return pl.BlockSpec(shape, lambda i: (0, 0))

    flops = 2 * Bp * (NOISE_SIZE * HIDDEN + LATENT_SIZE * HIDDEN
                      + HIDDEN * HIDDEN + HIDDEN * HIDDEN + HIDDEN * OUTPUT_DIM)
    weight_bytes = (w1n.size + w2b.size + w3b.size + w4b.size) * 2 \
                   + (w1l.size + b1.size + b2.size + b3.size + b4.size) * 4
    bytes_accessed = Bp * (INPUT_DIM + OUTPUT_DIM) * 4 + weight_bytes

    out = pl.pallas_call(
        _generator_kernel,
        out_shape=jax.ShapeDtypeStruct((Bp, OUTPUT_DIM), jnp.float32),
        grid_spec=pltpu.PrefetchScalarGridSpec(
            num_scalar_prefetch=0,
            grid=grid,
            in_specs=[
                pl.BlockSpec((tb, NOISE_SIZE), lambda i: (i, 0)),   # noise tile
                pl.BlockSpec((tb, LATENT_SIZE), lambda i: (i, 0)),  # latent tile
                rep(w1n.shape), rep(w1l.shape), rep(b1.shape),
                rep(w2b.shape), rep(b2.shape),
                rep(w3b.shape), rep(b3.shape),
                rep(w4b.shape), rep(b4.shape),
            ],
            out_specs=pl.BlockSpec((tb, OUTPUT_DIM), lambda i: (i, 0)),
        ),
        compiler_params=pltpu.CompilerParams(
            dimension_semantics=("parallel",)),
        cost_estimate=pl.CostEstimate(
            flops=flops, transcendentals=0, bytes_accessed=bytes_accessed),
    )(noise, latent, w1n, w1l, b1, w2b, b2, w3b, b3, w4b, b4)

    return out[:B]


def init_params(key):
    """Deterministic init mimicking utils.initialize_weights:
    Linear weights ~ N(0, 0.02), biases = 0. Weights stored as (in, out)."""
    ks = jax.random.split(key, 4)
    dims = [(INPUT_DIM, HIDDEN), (HIDDEN, HIDDEN),
            (HIDDEN, HIDDEN), (HIDDEN, OUTPUT_DIM)]
    params = []
    for k, (din, dout) in zip(ks, dims):
        w = (0.02 * jax.random.normal(k, (din, dout))).astype(jnp.float32)
        b = jnp.zeros((1, dout), dtype=jnp.float32)
        params += [w, b]
    return tuple(params)


def _reference(noise, latent, params):
    w1, b1, w2, b2, w3, b3, w4, b4 = params
    x = jnp.concatenate([noise, latent], axis=1)
    h = jnp.maximum(x @ w1 + b1, 0.0)
    h = jnp.maximum(h @ w2 + b2, 0.0)
    h = jnp.maximum(h @ w3 + b3, 0.0)
    return h @ w4 + b4


if __name__ == "__main__":
    key = jax.random.PRNGKey(0)
    k_noise, k_latent, k_params = jax.random.split(key, 3)
    params = init_params(k_params)

    # Main case: B=512 with tile_b=256 -> grid of 2 (keeps both v7x TCs busy).
    B = 512
    noise = jax.random.normal(k_noise, (B, NOISE_SIZE), dtype=jnp.float32)
    latent = jax.random.normal(k_latent, (B, LATENT_SIZE), dtype=jnp.float32)

    fwd = jax.jit(functools.partial(generator_forward, tile_b=256))
    out = jax.block_until_ready(fwd(noise, latent, params))
    ref = _reference(noise, latent, params)
    assert out.shape == (B, OUTPUT_DIM)
    # bf16 matmuls with f32 accumulation: loose-ish tolerance vs f32 reference.
    assert jnp.allclose(out, ref, atol=1e-2, rtol=5e-2), \
        float(jnp.max(jnp.abs(out - ref)))

    # Ragged batch (exercises the padding path; tile clamps to the batch).
    Br = 37
    noise_r = noise[:Br]
    latent_r = latent[:Br]
    out_r = jax.block_until_ready(generator_forward(noise_r, latent_r, params))
    ref_r = _reference(noise_r, latent_r, params)
    assert out_r.shape == (Br, OUTPUT_DIM)
    assert jnp.allclose(out_r, ref_r, atol=1e-2, rtol=5e-2)

    print("KERNEL_OK")
</pallas_src>

<mosaic_0001>
module attributes {stable_mosaic.version = 11 : i64} {
  func.func @_generator_kernel(%arg0: i32, %arg1: memref<256x10xf32, #tpu.memory_space<vmem>>, %arg2: memref<256x1xf32, #tpu.memory_space<vmem>>, %arg3: memref<10x256xbf16, #tpu.memory_space<vmem>>, %arg4: memref<1x256xf32, #tpu.memory_space<vmem>>, %arg5: memref<1x256xf32, #tpu.memory_space<vmem>>, %arg6: memref<256x256xbf16, #tpu.memory_space<vmem>>, %arg7: memref<1x256xf32, #tpu.memory_space<vmem>>, %arg8: memref<256x256xbf16, #tpu.memory_space<vmem>>, %arg9: memref<1x256xf32, #tpu.memory_space<vmem>>, %arg10: memref<256x1xbf16, #tpu.memory_space<vmem>>, %arg11: memref<1x1xf32, #tpu.memory_space<vmem>>, %arg12: memref<256x1xf32, #tpu.memory_space<vmem>>) attributes {dimension_semantics = [#tpu.dimension_semantics<parallel>], iteration_bounds = array<i64: 2>, scalar_prefetch = 0 : i64, scratch_operands = 0 : i64, tpu.core_type = #tpu.core_type<tc>, window_params = [{transform_indices = @transform_0, window_bounds = array<i64: 256, 10>}, {transform_indices = @transform_1, window_bounds = array<i64: 256, 1>}, {pipeline_mode = #tpu.pipeline_mode<synchronous>, transform_indices = @transform_2, window_bounds = array<i64: 10, 256>}, {pipeline_mode = #tpu.pipeline_mode<synchronous>, transform_indices = @transform_3, window_bounds = array<i64: 1, 256>}, {pipeline_mode = #tpu.pipeline_mode<synchronous>, transform_indices = @transform_4, window_bounds = array<i64: 1, 256>}, {pipeline_mode = #tpu.pipeline_mode<synchronous>, transform_indices = @transform_5, window_bounds = array<i64: 256, 256>}, {pipeline_mode = #tpu.pipeline_mode<synchronous>, transform_indices = @transform_6, window_bounds = array<i64: 1, 256>}, {pipeline_mode = #tpu.pipeline_mode<synchronous>, transform_indices = @transform_7, window_bounds = array<i64: 256, 256>}, {pipeline_mode = #tpu.pipeline_mode<synchronous>, transform_indices = @transform_8, window_bounds = array<i64: 1, 256>}, {pipeline_mode = #tpu.pipeline_mode<synchronous>, transform_indices = @transform_9, window_bounds = array<i64: 256, 1>}, {pipeline_mode = #tpu.pipeline_mode<synchronous>, transform_indices = @transform_10, window_bounds = array<i64: 1, 1>}, {transform_indices = @transform_11, window_bounds = array<i64: 256, 1>}]} {
    %c0 = arith.constant 0 : index
    %c0_0 = arith.constant 0 : index
    %0 = vector.load %arg1[%c0, %c0_0] : memref<256x10xf32, #tpu.memory_space<vmem>>, vector<256x10xf32>
    %1 = arith.truncf %0 : vector<256x10xf32> to vector<256x10xbf16>
    %c0_1 = arith.constant 0 : index
    %c0_2 = arith.constant 0 : index
    %2 = vector.load %arg2[%c0_1, %c0_2] : memref<256x1xf32, #tpu.memory_space<vmem>>, vector<256x1xf32>
    %c0_3 = arith.constant 0 : index
    %c0_4 = arith.constant 0 : index
    %3 = vector.load %arg3[%c0_3, %c0_4] : memref<10x256xbf16, #tpu.memory_space<vmem>>, vector<10x256xbf16>
    %cst = arith.constant dense<0.000000e+00> : vector<256x256xf32>
    %4 = tpu.matmul %1, %3, %cst {dimension_numbers = #tpu.dot_dimension_numbers<[1], [0], [0], [1], [0, 0, 1, 1], [], []>} : vector<256x10xbf16>, vector<10x256xbf16>, vector<256x256xf32> -> vector<256x256xf32>
    %c0_5 = arith.constant 0 : index
    %c0_6 = arith.constant 0 : index
    %5 = vector.load %arg4[%c0_5, %c0_6] : memref<1x256xf32, #tpu.memory_space<vmem>>, vector<1x256xf32>
    %6 = vector.broadcast %2 : vector<256x1xf32> to vector<256x256xf32>
    %7 = vector.broadcast %5 : vector<1x256xf32> to vector<256x256xf32>
    %8 = arith.mulf %6, %7 : vector<256x256xf32>
    %9 = arith.addf %4, %8 : vector<256x256xf32>
    %c0_7 = arith.constant 0 : index
    %c0_8 = arith.constant 0 : index
    %10 = vector.load %arg5[%c0_7, %c0_8] : memref<1x256xf32, #tpu.memory_space<vmem>>, vector<1x256xf32>
    %11 = vector.broadcast %10 : vector<1x256xf32> to vector<256x256xf32>
    %12 = arith.addf %9, %11 : vector<256x256xf32>
    %cst_9 = arith.constant 0.000000e+00 : f32
    %13 = vector.broadcast %cst_9 : f32 to vector<256x256xf32>
    %14 = arith.maximumf %12, %13 : vector<256x256xf32>
    %15 = arith.truncf %14 : vector<256x256xf32> to vector<256x256xbf16>
    %c0_10 = arith.constant 0 : index
    %c0_11 = arith.constant 0 : index
    %16 = vector.load %arg6[%c0_10, %c0_11] : memref<256x256xbf16, #tpu.memory_space<vmem>>, vector<256x256xbf16>
    %cst_12 = arith.constant dense<0.000000e+00> : vector<256x256xf32>
    %17 = tpu.matmul %15, %16, %cst_12 {dimension_numbers = #tpu.dot_dimension_numbers<[1], [0], [0], [1], [0, 0, 1, 1], [], []>} : vector<256x256xbf16>, vector<256x256xbf16>, vector<256x256xf32> -> vector<256x256xf32>
    %c0_13 = arith.constant 0 : index
    %c0_14 = arith.constant 0 : index
    %18 = vector.load %arg7[%c0_13, %c0_14] : memref<1x256xf32, #tpu.memory_space<vmem>>, vector<1x256xf32>
    %19 = vector.broadcast %18 : vector<1x256xf32> to vector<256x256xf32>
    %20 = arith.addf %17, %19 : vector<256x256xf32>
    %cst_15 = arith.constant 0.000000e+00 : f32
    %21 = vector.broadcast %cst_15 : f32 to vector<256x256xf32>
    %22 = arith.maximumf %20, %21 : vector<256x256xf32>
    %23 = arith.truncf %22 : vector<256x256xf32> to vector<256x256xbf16>
    %c0_16 = arith.constant 0 : index
    %c0_17 = arith.constant 0 : index
    %24 = vector.load %arg8[%c0_16, %c0_17] : memref<256x256xbf16, #tpu.memory_space<vmem>>, vector<256x256xbf16>
    %cst_18 = arith.constant dense<0.000000e+00> : vector<256x256xf32>
    %25 = tpu.matmul %23, %24, %cst_18 {dimension_numbers = #tpu.dot_dimension_numbers<[1], [0], [0], [1], [0, 0, 1, 1], [], []>} : vector<256x256xbf16>, vector<256x256xbf16>, vector<256x256xf32> -> vector<256x256xf32>
    %c0_19 = arith.constant 0 : index
    %c0_20 = arith.constant 0 : index
    %26 = vector.load %arg9[%c0_19, %c0_20] : memref<1x256xf32, #tpu.memory_space<vmem>>, vector<1x256xf32>
    %27 = vector.broadcast %26 : vector<1x256xf32> to vector<256x256xf32>
    %28 = arith.addf %25, %27 : vector<256x256xf32>
    %cst_21 = arith.constant 0.000000e+00 : f32
    %29 = vector.broadcast %cst_21 : f32 to vector<256x256xf32>
    %30 = arith.maximumf %28, %29 : vector<256x256xf32>
    %31 = arith.truncf %30 : vector<256x256xf32> to vector<256x256xbf16>
    %c0_22 = arith.constant 0 : index
    %c0_23 = arith.constant 0 : index
    %32 = vector.load %arg10[%c0_22, %c0_23] : memref<256x1xbf16, #tpu.memory_space<vmem>>, vector<256x1xbf16>
    %cst_24 = arith.constant dense<0.000000e+00> : vector<256x1xf32>
    %33 = tpu.matmul %31, %32, %cst_24 {dimension_numbers = #tpu.dot_dimension_numbers<[1], [0], [0], [1], [0, 0, 1, 1], [], []>} : vector<256x256xbf16>, vector<256x1xbf16>, vector<256x1xf32> -> vector<256x1xf32>
    %c0_25 = arith.constant 0 : index
    %c0_26 = arith.constant 0 : index
    %34 = vector.load %arg11[%c0_25, %c0_26] : memref<1x1xf32, #tpu.memory_space<vmem>>, vector<1x1xf32>
    %35 = vector.broadcast %34 : vector<1x1xf32> to vector<256x1xf32>
    %36 = arith.addf %33, %35 : vector<256x1xf32>
    %c0_27 = arith.constant 0 : index
    %c0_28 = arith.constant 0 : index
    %37 = vector.load %arg12[%c0_27, %c0_28] : memref<256x1xf32, #tpu.memory_space<vmem>>, vector<256x1xf32>
    tpu.vector_store %arg12[%c0_27, %c0_28], %36 {strides = array<i32>} : memref<256x1xf32, #tpu.memory_space<vmem>>, vector<256x1xf32>,
    return
  }
  func.func @transform_0(%arg0: i32) -> (i32, i32) {
    %c0_i32 = arith.constant 0 : i32
    %c0_i32_0 = arith.constant 0 : i32
    return %arg0, %c0_i32 : i32, i32
  }
  func.func @transform_1(%arg0: i32) -> (i32, i32) {
    %c0_i32 = arith.constant 0 : i32
    %c0_i32_0 = arith.constant 0 : i32
    return %arg0, %c0_i32 : i32, i32
  }
  func.func @transform_2(%arg0: i32) -> (i32, i32) {
    %c0_i32 = arith.constant 0 : i32
    %c0_i32_0 = arith.constant 0 : i32
    %c0_i32_1 = arith.constant 0 : i32
    return %c0_i32, %c0_i32_0 : i32, i32
  }
  func.func @transform_3(%arg0: i32) -> (i32, i32) {
    %c0_i32 = arith.constant 0 : i32
    %c0_i32_0 = arith.constant 0 : i32
    %c0_i32_1 = arith.constant 0 : i32
    return %c0_i32, %c0_i32_0 : i32, i32
  }
  func.func @transform_4(%arg0: i32) -> (i32, i32) {
    %c0_i32 = arith.constant 0 : i32
    %c0_i32_0 = arith.constant 0 : i32
    %c0_i32_1 = arith.constant 0 : i32
    return %c0_i32, %c0_i32_0 : i32, i32
  }
  func.func @transform_5(%arg0: i32) -> (i32, i32) {
    %c0_i32 = arith.constant 0 : i32
    %c0_i32_0 = arith.constant 0 : i32
    %c0_i32_1 = arith.constant 0 : i32
    return %c0_i32, %c0_i32_0 : i32, i32
  }
  func.func @transform_6(%arg0: i32) -> (i32, i32) {
    %c0_i32 = arith.constant 0 : i32
    %c0_i32_0 = arith.constant 0 : i32
    %c0_i32_1 = arith.constant 0 : i32
    return %c0_i32, %c0_i32_0 : i32, i32
  }
  func.func @transform_7(%arg0: i32) -> (i32, i32) {
    %c0_i32 = arith.constant 0 : i32
    %c0_i32_0 = arith.constant 0 : i32
    %c0_i32_1 = arith.constant 0 : i32
    return %c0_i32, %c0_i32_0 : i32, i32
  }
  func.func @transform_8(%arg0: i32) -> (i32, i32) {
    %c0_i32 = arith.constant 0 : i32
    %c0_i32_0 = arith.constant 0 : i32
    %c0_i32_1 = arith.constant 0 : i32
    return %c0_i32, %c0_i32_0 : i32, i32
  }
  func.func @transform_9(%arg0: i32) -> (i32, i32) {
    %c0_i32 = arith.constant 0 : i32
    %c0_i32_0 = arith.constant 0 : i32
    %c0_i32_1 = arith.constant 0 : i32
    return %c0_i32, %c0_i32_0 : i32, i32
  }
  func.func @transform_10(%arg0: i32) -> (i32, i32) {
    %c0_i32 = arith.constant 0 : i32
    %c0_i32_0 = arith.constant 0 : i32
    %c0_i32_1 = arith.constant 0 : i32
    return %c0_i32, %c0_i32_0 : i32, i32
  }
  func.func @transform_11(%arg0: i32) -> (i32, i32) {
    %c0_i32 = arith.constant 0 : i32
    %c0_i32_0 = arith.constant 0 : i32
    return %arg0, %c0_i32 : i32, i32
  }
}

</mosaic_0001>

<llo_original>
// kernel: generator_forward.1
$region0: #{generator_forward.1}
  #allocation0 [shape = 'u32[]', space=smem, size = 0x4, offset = 0x4, fixed_abs, tag = 'smem constant byte address 0x4 - core index']
  #allocation1 [shape = 'u32[144,128]{1,0:T(1,128)}', space=vmem, size = 0x12000, scoped, tag = 'internal scratch']
  #allocation2 [shape = 'f32[1,1]{1,0:T(1,128)S(1)}', space=vmem, size = 0x200, scoped, tag = 'scoped memory for generator_forward.1']
  %s0 = inlined_call_operand.vmem [shape: f32[512,10], index: 0, kind: input, shape index: {}]
  %s1 = inlined_call_operand.vmem [shape: f32[512,1], index: 1, kind: input, shape index: {}]
  %s2 = inlined_call_operand.vmem [shape: bf16[10,256], index: 2, kind: input, shape index: {}]
  %s3 = inlined_call_operand.vmem [shape: f32[1,256], index: 3, kind: input, shape index: {}]
  %s4 = inlined_call_operand.vmem [shape: f32[1,256], index: 4, kind: input, shape index: {}]
  %s5 = inlined_call_operand.vmem [shape: bf16[256,256], index: 5, kind: input, shape index: {}]
  %s6 = inlined_call_operand.vmem [shape: f32[1,256], index: 6, kind: input, shape index: {}]
  %s7 = inlined_call_operand.vmem [shape: bf16[256,256], index: 7, kind: input, shape index: {}]
  %s8 = inlined_call_operand.vmem [shape: f32[1,256], index: 8, kind: input, shape index: {}]
  %s9 = inlined_call_operand.vmem [shape: bf16[256,1], index: 9, kind: input, shape index: {}]
  %s10 = inlined_call_operand.<no memory space> [shape: f32[1,1], index: 10, kind: input, shape index: {}]
  %s11 = inlined_call_operand.vmem [shape: f32[512,1], index: 11, kind: output, shape index: {}]
  %s12 = sld [smem:[#allocation0]]
  $region77: #{generator_forward.1} parent=0
    _
  %s14 = ssub.s32 1, %s12
  %s15 = scalar_select 0, %s14, %s12
  %v16 = vstv %s10
  %17 = vst [vmem:[#allocation2] sm:$0x1] %v16
  loop: start=0, step=1, limit=4
  $region2: #{generator_forward.1} parent=0 // loop_pre_header
    _
  $region3: #{generator_forward.1} parent=0 // loop_header
    %s19 = sphi 0, %s23
    %p20 = scmp.ge.s32.totalorder %s19, 4
    %s29 = sphi 0, %s31
    %s32 = sphi 0, %s29
    %s33 = sphi 0, %s32
    %s49 = sphi 0, %s33
    %s55 = sphi 0, %s57
    %s58 = sphi 0, %s55
    %s59 = sphi 0, %s58
    %s75 = sphi 0, %s59
    %s79 = sphi 0, %s79
    %s81 = sphi 0, %s79
    %s82 = sphi 0, %s81
    %s96 = sphi 0, %s82
    %s100 = sphi 0, %s100
    %s102 = sphi 0, %s100
    %s103 = sphi 0, %s102
    %s117 = sphi 0, %s103
    %s121 = sphi 0, %s121
    %s123 = sphi 0, %s121
    %s124 = sphi 0, %s123
    %s138 = sphi 0, %s124
    %s142 = sphi 0, %s142
    %s144 = sphi 0, %s142
    %s145 = sphi 0, %s144
    %s159 = sphi 0, %s145
    %s163 = sphi 0, %s163
    %s165 = sphi 0, %s163
    %s166 = sphi 0, %s165
    %s180 = sphi 0, %s166
    %s184 = sphi 0, %s184
    %s186 = sphi 0, %s184
    %s187 = sphi 0, %s186
    %s201 = sphi 0, %s187
    %s205 = sphi 0, %s205
    %s207 = sphi 0, %s205
    %s208 = sphi 0, %s207
    %s222 = sphi 0, %s208
    %s226 = sphi 0, %s226
    %s228 = sphi 0, %s226
    %s229 = sphi 0, %s228
    %s243 = sphi 0, %s229
    %s247 = sphi 0, %s247
    %s249 = sphi 0, %s247
    %s250 = sphi 0, %s249
    %s264 = sphi 0, %s250
    %s270 = sphi 0, %s272
    %s273 = sphi 0, %s270
    %s274 = sphi 0, %s273
    %s290 = sphi 0, %s274
  $region4: #{generator_forward.1} parent=0 // loop_header_branch
    %22 = sbr.rel (%p20) target = $region8
  $region5: #{generator_forward.1} parent=0 // loop_body
    %s24 = ssub.s32 %s19, 1
    %s25 = ssub.s32 %s19, 2
    %s26 = sadd.s32 %s19, 1
    %s27 = ssub.s32 %s19, %s26
    %p28 = scmp.eq.s32.totalorder %s27, 0
    %s30 = sadd.s32 %s29, 1
    %s31 = scalar_select %p28, %s29, %s30
    %p34 = pneg %p28
    %p35 = scmp.eq.s32.totalorder %s19, 1
    %p36 = por %p34, %p35
    %p37 = scmp.ne.s32.totalorder %s29, %s32
    %p38 = scmp.eq.s32.totalorder %s19, 0
    %p39 = por %p37, %p38
    %p40 = scmp.ne.s32.totalorder %s29, %s32
    %p41 = scmp.eq.s32.totalorder %s24, 1
    %p42 = por %p40, %p41
    %p43 = scmp.ne.s32.totalorder %s32, %s33
    %p44 = scmp.eq.s32.totalorder %s24, 0
    %p45 = por %p43, %p44
    %p46 = scmp.ne.s32.totalorder %s32, %s33
    %p47 = scmp.eq.s32.totalorder %s25, 1
    %p48 = por %p46, %p47
    %p50 = scmp.ne.s32.totalorder %s33, %s49
    %p51 = scmp.eq.s32.totalorder %s25, 0
    %p52 = por %p50, %p51
    %s53 = ssub.s32 %s19, %s26
    %p54 = scmp.eq.s32.totalorder %s53, 0
    %s56 = sadd.s32 %s55, 1
    %s57 = scalar_select %p54, %s55, %s56
    %p60 = pneg %p54
    %p61 = scmp.eq.s32.totalorder %s19, 1
    %p62 = por %p60, %p61
    %p63 = scmp.ne.s32.totalorder %s55, %s58
    %p64 = scmp.eq.s32.totalorder %s19, 0
    %p65 = por %p63, %p64
    %p66 = scmp.ne.s32.totalorder %s55, %s58
    %p67 = scmp.eq.s32.totalorder %s24, 1
    %p68 = por %p66, %p67
    %p69 = scmp.ne.s32.totalorder %s58, %s59
    %p70 = scmp.eq.s32.totalorder %s24, 0
    %p71 = por %p69, %p70
    %p72 = scmp.ne.s32.totalorder %s58, %s59
    %p73 = scmp.eq.s32.totalorder %s25, 1
    %p74 = por %p72, %p73
    %p76 = scmp.ne.s32.totalorder %s59, %s75
    %p77 = scmp.eq.s32.totalorder %s25, 0
    %p78 = por %p76, %p77
    %s80 = sadd.s32 %s79, 1
    %p83 = scmp.eq.s32.totalorder %s19, 1
    %p84 = scmp.ne.s32.totalorder %s79, %s81
    %p85 = scmp.eq.s32.totalorder %s19, 0
    %p86 = por %p84, %p85
    %p87 = scmp.ne.s32.totalorder %s79, %s81
    %p88 = scmp.eq.s32.totalorder %s24, 1
    %p89 = por %p87, %p88
    %p90 = scmp.ne.s32.totalorder %s81, %s82
    %p91 = scmp.eq.s32.totalorder %s24, 0
    %p92 = por %p90, %p91
    %p93 = scmp.ne.s32.totalorder %s81, %s82
    %p94 = scmp.eq.s32.totalorder %s25, 1
    %p95 = por %p93, %p94
    %p97 = scmp.ne.s32.totalorder %s82, %s96
    %p98 = scmp.eq.s32.totalorder %s25, 0
    %p99 = por %p97, %p98
    %s101 = sadd.s32 %s100, 1
    %p104 = scmp.eq.s32.totalorder %s19, 1
    %p105 = scmp.ne.s32.totalorder %s100, %s102
    %p106 = scmp.eq.s32.totalorder %s19, 0
    %p107 = por %p105, %p106
    %p108 = scmp.ne.s32.totalorder %s100, %s102
    %p109 = scmp.eq.s32.totalorder %s24, 1
    %p110 = por %p108, %p109
    %p111 = scmp.ne.s32.totalorder %s102, %s103
    %p112 = scmp.eq.s32.totalorder %s24, 0
    %p113 = por %p111, %p112
    %p114 = scmp.ne.s32.totalorder %s102, %s103
    %p115 = scmp.eq.s32.totalorder %s25, 1
    %p116 = por %p114, %p115
    %p118 = scmp.ne.s32.totalorder %s103, %s117
    %p119 = scmp.eq.s32.totalorder %s25, 0
    %p120 = por %p118, %p119
    %s122 = sadd.s32 %s121, 1
    %p125 = scmp.eq.s32.totalorder %s19, 1
    %p126 = scmp.ne.s32.totalorder %s121, %s123
    %p127 = scmp.eq.s32.totalorder %s19, 0
    %p128 = por %p126, %p127
    %p129 = scmp.ne.s32.totalorder %s121, %s123
    %p130 = scmp.eq.s32.totalorder %s24, 1
    %p131 = por %p129, %p130
    %p132 = scmp.ne.s32.totalorder %s123, %s124
    %p133 = scmp.eq.s32.totalorder %s24, 0
    %p134 = por %p132, %p133
    %p135 = scmp.ne.s32.totalorder %s123, %s124
    %p136 = scmp.eq.s32.totalorder %s25, 1
    %p137 = por %p135, %p136
    %p139 = scmp.ne.s32.totalorder %s124, %s138
    %p140 = scmp.eq.s32.totalorder %s25, 0
    %p141 = por %p139, %p140
    %s143 = sadd.s32 %s142, 1
    %p146 = scmp.eq.s32.totalorder %s19, 1
    %p147 = scmp.ne.s32.totalorder %s142, %s144
    %p148 = scmp.eq.s32.totalorder %s19, 0
    %p149 = por %p147, %p148
    %p150 = scmp.ne.s32.totalorder %s142, %s144
    %p151 = scmp.eq.s32.totalorder %s24, 1
    %p152 = por %p150, %p151
    %p153 = scmp.ne.s32.totalorder %s144, %s145
    %p154 = scmp.eq.s32.totalorder %s24, 0
    %p155 = por %p153, %p154
    %p156 = scmp.ne.s32.totalorder %s144, %s145
    %p157 = scmp.eq.s32.totalorder %s25, 1
    %p158 = por %p156, %p157
    %p160 = scmp.ne.s32.totalorder %s145, %s159
    %p161 = scmp.eq.s32.totalorder %s25, 0
    %p162 = por %p160, %p161
    %s164 = sadd.s32 %s163, 1
    %p167 = scmp.eq.s32.totalorder %s19, 1
    %p168 = scmp.ne.s32.totalorder %s163, %s165
    %p169 = scmp.eq.s32.totalorder %s19, 0
    %p170 = por %p168, %p169
    %p171 = scmp.ne.s32.totalorder %s163, %s165
    %p172 = scmp.eq.s32.totalorder %s24, 1
    %p173 = por %p171, %p172
    %p174 = scmp.ne.s32.totalorder %s165, %s166
    %p175 = scmp.eq.s32.totalorder %s24, 0
    %p176 = por %p174, %p175
    %p177 = scmp.ne.s32.totalorder %s165, %s166
    %p178 = scmp.eq.s32.totalorder %s25, 1
    %p179 = por %p177, %p178
    %p181 = scmp.ne.s32.totalorder %s166, %s180
    %p182 = scmp.eq.s32.totalorder %s25, 0
    %p183 = por %p181, %p182
    %s185 = sadd.s32 %s184, 1
    %p188 = scmp.eq.s32.totalorder %s19, 1
    %p189 = scmp.ne.s32.totalorder %s184, %s186
    %p190 = scmp.eq.s32.totalorder %s19, 0
    %p191 = por %p189, %p190
    %p192 = scmp.ne.s32.totalorder %s184, %s186
    %p193 = scmp.eq.s32.totalorder %s24, 1
    %p194 = por %p192, %p193
    %p195 = scmp.ne.s32.totalorder %s186, %s187
    %p196 = scmp.eq.s32.totalorder %s24, 0
    %p197 = por %p195, %p196
    %p198 = scmp.ne.s32.totalorder %s186, %s187
    %p199 = scmp.eq.s32.totalorder %s25, 1
    %p200 = por %p198, %p199
    %p202 = scmp.ne.s32.totalorder %s187, %s201
    %p203 = scmp.eq.s32.totalorder %s25, 0
    %p204 = por %p202, %p203
    %s206 = sadd.s32 %s205, 1
    %p209 = scmp.eq.s32.totalorder %s19, 1
    %p210 = scmp.ne.s32.totalorder %s205, %s207
    %p211 = scmp.eq.s32.totalorder %s19, 0
    %p212 = por %p210, %p211
    %p213 = scmp.ne.s32.totalorder %s205, %s207
    %p214 = scmp.eq.s32.totalorder %s24, 1
    %p215 = por %p213, %p214
    %p216 = scmp.ne.s32.totalorder %s207, %s208
    %p217 = scmp.eq.s32.totalorder %s24, 0
    %p218 = por %p216, %p217
    %p219 = scmp.ne.s32.totalorder %s207, %s208
    %p220 = scmp.eq.s32.totalorder %s25, 1
    %p221 = por %p219, %p220
    %p223 = scmp.ne.s32.totalorder %s208, %s222
    %p224 = scmp.eq.s32.totalorder %s25, 0
    %p225 = por %p223, %p224
    %s227 = sadd.s32 %s226, 1
    %p230 = scmp.eq.s32.totalorder %s19, 1
    %p231 = scmp.ne.s32.totalorder %s226, %s228
    %p232 = scmp.eq.s32.totalorder %s19, 0
    %p233 = por %p231, %p232
    %p234 = scmp.ne.s32.totalorder %s226, %s228
    %p235 = scmp.eq.s32.totalorder %s24, 1
    %p236 = por %p234, %p235
    %p237 = scmp.ne.s32.totalorder %s228, %s229
    %p238 = scmp.eq.s32.totalorder %s24, 0
    %p239 = por %p237, %p238
    %p240 = scmp.ne.s32.totalorder %s228, %s229
    %p241 = scmp.eq.s32.totalorder %s25, 1
    %p242 = por %p240, %p241
    %p244 = scmp.ne.s32.totalorder %s229, %s243
    %p245 = scmp.eq.s32.totalorder %s25, 0
    %p246 = por %p244, %p245
    %s248 = sadd.s32 %s247, 1
    %p251 = scmp.eq.s32.totalorder %s19, 1
    %p252 = scmp.ne.s32.totalorder %s247, %s249
    %p253 = scmp.eq.s32.totalorder %s19, 0
    %p254 = por %p252, %p253
    %p255 = scmp.ne.s32.totalorder %s247, %s249
    %p256 = scmp.eq.s32.totalorder %s24, 1
    %p257 = por %p255, %p256
    %p258 = scmp.ne.s32.totalorder %s249, %s250
    %p259 = scmp.eq.s32.totalorder %s24, 0
    %p260 = por %p258, %p259
    %p261 = scmp.ne.s32.totalorder %s249, %s250
    %p262 = scmp.eq.s32.totalorder %s25, 1
    %p263 = por %p261, %p262
    %p265 = scmp.ne.s32.totalorder %s250, %s264
    %p266 = scmp.eq.s32.totalorder %s25, 0
    %p267 = por %p265, %p266
    %s268 = ssub.s32 %s19, %s26
    %p269 = scmp.eq.s32.totalorder %s268, 0
    %s271 = sadd.s32 %s270, 1
    %s272 = scalar_select %p269, %s270, %s271
    %p275 = pneg %p269
    %p276 = scmp.eq.s32.totalorder %s19, 1
    %p277 = por %p275, %p276
    %p278 = scmp.ne.s32.totalorder %s270, %s273
    %p279 = scmp.eq.s32.totalorder %s19, 0
    %p280 = por %p278, %p279
    %p281 = scmp.ne.s32.totalorder %s270, %s273
    %p282 = scmp.eq.s32.totalorder %s24, 1
    %p283 = por %p281, %p282
    %p284 = scmp.ne.s32.totalorder %s273, %s274
    %p285 = scmp.eq.s32.totalorder %s24, 0
    %p286 = por %p284, %p285
    %p287 = scmp.ne.s32.totalorder %s273, %s274
    %p288 = scmp.eq.s32.totalorder %s25, 1
    %p289 = por %p287, %p288
    %p291 = scmp.ne.s32.totalorder %s274, %s290
    %p292 = scmp.eq.s32.totalorder %s25, 0
    %p293 = por %p291, %p292
    %p294 = scmp.le.s32.totalorder 1, %s19
    %p295 = scmp.lt.s32.totalorder %s19, 3
    %p296 = pnand %p294, %p295
    %p297 = pneg %p296
    // Predicated region
    $region9: #{generator_forward.1} parent=5 // pred_check
      _
    $region10: #{generator_forward.1} parent=5 // pred_check_branch
      %299 = sbr.rel (%p296) target = $region12
    $region11: #{generator_forward.1} parent=5 // pred_region
      %s300 = ssub.s32 %s19, 1
      // Predicated region
      $region13: #{generator_forward.1} parent=11 // pred_check
        %p301 = pneg %p92
      $region14: #{generator_forward.1} parent=11 // pred_check_branch
        %303 = sbr.rel (%p301) target = $region16
      $region15: #{generator_forward.1} parent=11 // pred_region
        _
      $region16: #{generator_forward.1} parent=11 // pred_fallthru
        _
      // Predicated region
      $region17: #{generator_forward.1} parent=11 // pred_check
        %p304 = pneg %p113
      $region18: #{generator_forward.1} parent=11 // pred_check_branch
        %306 = sbr.rel (%p304) target = $region20
      $region19: #{generator_forward.1} parent=11 // pred_region
        _
      $region20: #{generator_forward.1} parent=11 // pred_fallthru
        _
      // Predicated region
      $region21: #{generator_forward.1} parent=11 // pred_check
        %p307 = pneg %p134
      $region22: #{generator_forward.1} parent=11 // pred_check_branch
        %309 = sbr.rel (%p307) target = $region24
      $region23: #{generator_forward.1} parent=11 // pred_region
        _
      $region24: #{generator_forward.1} parent=11 // pred_fallthru
        _
      // Predicated region
      $region25: #{generator_forward.1} parent=11 // pred_check
        %p310 = pneg %p155
      $region26: #{generator_forward.1} parent=11 // pred_check_branch
        %312 = sbr.rel (%p310) target = $region28
      $region27: #{generator_forward.1} parent=11 // pred_region
        _
      $region28: #{generator_forward.1} parent=11 // pred_fallthru
        _
      // Predicated region
      $region29: #{generator_forward.1} parent=11 // pred_check
        %p313 = pneg %p176
      $region30: #{generator_forward.1} parent=11 // pred_check_branch
        %315 = sbr.rel (%p313) target = $region32
      $region31: #{generator_forward.1} parent=11 // pred_region
        _
      $region32: #{generator_forward.1} parent=11 // pred_fallthru
        _
      // Predicated region
      $region33: #{generator_forward.1} parent=11 // pred_check
        %p316 = pneg %p197
      $region34: #{generator_forward.1} parent=11 // pred_check_branch
        %318 = sbr.rel (%p316) target = $region36
      $region35: #{generator_forward.1} parent=11 // pred_region
        _
      $region36: #{generator_forward.1} parent=11 // pred_fallthru
        _
      // Predicated region
      $region37: #{generator_forward.1} parent=11 // pred_check
        %p319 = pneg %p218
      $region38: #{generator_forward.1} parent=11 // pred_check_branch
        %321 = sbr.rel (%p319) target = $region40
      $region39: #{generator_forward.1} parent=11 // pred_region
        _
      $region40: #{generator_forward.1} parent=11 // pred_fallthru
        _
      // Predicated region
      $region41: #{generator_forward.1} parent=11 // pred_check
        %p322 = pneg %p239
      $region42: #{generator_forward.1} parent=11 // pred_check_branch
        %324 = sbr.rel (%p322) target = $region44
      $region43: #{generator_forward.1} parent=11 // pred_region
        _
      $region44: #{generator_forward.1} parent=11 // pred_fallthru
        _
      // Predicated region
      $region45: #{generator_forward.1} parent=11 // pred_check
        %p325 = pneg %p260
      $region46: #{generator_forward.1} parent=11 // pred_check_branch
        %327 = sbr.rel (%p325) target = $region48
      $region47: #{generator_forward.1} parent=11 // pred_region
        _
      $region48: #{generator_forward.1} parent=11 // pred_fallthru
        _
    $region12: #{generator_forward.1} parent=5 // pred_fallthru
      _
    %p328 = scmp.lt.s32.totalorder %s19, 2
    // Predicated region
    $region49: #{generator_forward.1} parent=5 // pred_check
      %p329 = pneg %p328
    $region50: #{generator_forward.1} parent=5 // pred_check_branch
      %331 = sbr.rel (%p329) target = $region52
    $region51: #{generator_forward.1} parent=5 // pred_region
      // Predicated region
      $region53: #{generator_forward.1} parent=51 // pred_check
        %p332 = pneg %p39
      $region54: #{generator_forward.1} parent=51 // pred_check_branch
        %334 = sbr.rel (%p332) target = $region56
      $region55: #{generator_forward.1} parent=51 // pred_region
        %s335 = smul.u32 32, %s19
        %p336 = scmp.lt.s32.totalorder %s335, 63
        %s337 = scalar_select %p336, %s335, 63
        %s338 = smul.addr %s337, 8
        %s339 = scalar_lea.vmem %s0, %s338
        %s340 = smul.u32 32, %s19
      $region56: #{generator_forward.1} parent=51 // pred_fallthru
        _
      // Predicated region
      $region57: #{generator_forward.1} parent=51 // pred_check
        %p341 = pneg %p65
      $region58: #{generator_forward.1} parent=51 // pred_check_branch
        %343 = sbr.rel (%p341) target = $region60
      $region59: #{generator_forward.1} parent=51 // pred_region
        %s344 = smul.u32 32, %s19
        %p345 = scmp.lt.s32.totalorder %s344, 63
        %s346 = scalar_select %p345, %s344, 63
        %s347 = smul.addr %s346, 8
        %s348 = scalar_lea.vmem %s1, %s347
        %s349 = smul.u32 32, %s19
      $region60: #{generator_forward.1} parent=51 // pred_fallthru
        _
    $region52: #{generator_forward.1} parent=5 // pred_fallthru
      _
    %p350 = scmp.le.s32.totalorder 1, %s19
    %p351 = scmp.lt.s32.totalorder %s19, 3
    %p352 = pnand %p350, %p351
    %p353 = pneg %p352
    // Predicated region
    $region61: #{generator_forward.1} parent=5 // pred_check
      _
    $region62: #{generator_forward.1} parent=5 // pred_check_branch
      %355 = sbr.rel (%p352) target = $region64
    $region63: #{generator_forward.1} parent=5 // pred_region
      %s356 = ssub.s32 %s19, 1
      %s357 = smul.u32 32, %s24
      %p358 = scmp.lt.s32.totalorder %s357, 63
      %s359 = scalar_select %p358, %s357, 63
      %s360 = smul.addr %s359, 8
      %s361 = scalar_lea.vmem %s0, %s360
      %p362 = pneg %p45
      %p363 = pneg %p42
      %s364 = smul.u32 32, %s24
      %p365 = scmp.lt.s32.totalorder %s364, 63
      %s366 = scalar_select %p365, %s364, 63
      %s367 = smul.addr %s366, 8
      %s368 = scalar_lea.vmem %s1, %s367
      %p369 = pneg %p71
      %p370 = pneg %p68
      %p371 = pneg %p92
      %p372 = pneg %p89
      %p373 = pneg %p113
      %p374 = pneg %p110
      %p375 = pneg %p134
      %p376 = pneg %p131
      %p377 = pneg %p155
      %p378 = pneg %p152
      %p379 = pneg %p176
      %p380 = pneg %p173
      %p381 = pneg %p197
      %p382 = pneg %p194
      %p383 = pneg %p218
      %p384 = pneg %p215
      %p385 = pneg %p239
      %p386 = pneg %p236
      %p387 = pneg %p260
      %p388 = pneg %p257
      %p389 = pneg %p286
      %p390 = pneg %p283
      %s391 = smul.u32 32, %s24
      %p392 = scmp.lt.s32.totalorder %s391, 63
      %s393 = scalar_select %p392, %s391, 63
      %s394 = smul.addr %s393, 8
      %s395 = scalar_lea.vmem %s11, %s394
      %s396 = smul.u32 32, %s24
      %p397 = scmp.lt.s32.totalorder %s396, 63
      %s398 = scalar_select %p397, %s396, 63
      %s399 = smul.addr %s398, 8
      %s400 = scalar_lea.vmem %s0, %s399
      %s401 = smul.u32 32, %s24
      %s402 = smul.u32 32, %s24
      %p403 = scmp.lt.s32.totalorder %s402, 63
      %s404 = scalar_select %p403, %s402, 63
      %s405 = smul.addr %s404, 8
      %s406 = scalar_lea.vmem %s1, %s405
      %s407 = smul.u32 32, %s24
      %s408 = smul.u32 32, %s24
      %p409 = scmp.lt.s32.totalorder %s408, 63
      %s410 = scalar_select %p409, %s408, 63
      %s411 = smul.addr %s410, 8
      %s412 = scalar_lea.vmem %s11, %s411
      %s413 = smul.u32 32, %s24
      %v415 = vld [vmem:[%s400] sm:$0xff]
      %v416 = vld [vmem:[%s400 + $0x8] sm:$0xff]
      %v417 = vld [vmem:[%s400 + $0x10] sm:$0xff]
      %v418 = vld [vmem:[%s400 + $0x18] sm:$0xff]
      %v419 = vld [vmem:[%s400 + $0x20] sm:$0xff]
      %v420 = vld [vmem:[%s400 + $0x28] sm:$0xff]
      %v421 = vld [vmem:[%s400 + $0x30] sm:$0xff]
      %v422 = vld [vmem:[%s400 + $0x38] sm:$0xff]
      %v423 = vld [vmem:[%s400 + $0x40] sm:$0xff]
      %v424 = vld [vmem:[%s400 + $0x48] sm:$0xff]
      %v425 = vld [vmem:[%s400 + $0x50] sm:$0xff]
      %v426 = vld [vmem:[%s400 + $0x58] sm:$0xff]
      %v427 = vld [vmem:[%s400 + $0x60] sm:$0xff]
      %v428 = vld [vmem:[%s400 + $0x68] sm:$0xff]
      %v429 = vld [vmem:[%s400 + $0x70] sm:$0xff]
      %v430 = vld [vmem:[%s400 + $0x78] sm:$0xff]
      %v431 = vld [vmem:[%s400 + $0x80] sm:$0xff]
      %v432 = vld [vmem:[%s400 + $0x88] sm:$0xff]
      %v433 = vld [vmem:[%s400 + $0x90] sm:$0xff]
      %v434 = vld [vmem:[%s400 + $0x98] sm:$0xff]
      %v435 = vld [vmem:[%s400 + $0xa0] sm:$0xff]
      %v436 = vld [vmem:[%s400 + $0xa8] sm:$0xff]
      %v437 = vld [vmem:[%s400 + $0xb0] sm:$0xff]
      %v438 = vld [vmem:[%s400 + $0xb8] sm:$0xff]
      %v439 = vld [vmem:[%s400 + $0xc0] sm:$0xff]
      %v440 = vld [vmem:[%s400 + $0xc8] sm:$0xff]
      %v441 = vld [vmem:[%s400 + $0xd0] sm:$0xff]
      %v442 = vld [vmem:[%s400 + $0xd8] sm:$0xff]
      %v443 = vld [vmem:[%s400 + $0xe0] sm:$0xff]
      %v444 = vld [vmem:[%s400 + $0xe8] sm:$0xff]
      %v445 = vld [vmem:[%s400 + $0xf0] sm:$0xff]
      %v446 = vld [vmem:[%s400 + $0xf8] sm:$0xff]
      %v447 = vpack.c.bf16 %v416, %v415
      %v448 = vpack.c.bf16 %v418, %v417
      %v449 = vpack.c.bf16 %v420, %v419
      %v450 = vpack.c.bf16 %v422, %v421
      %v451 = vpack.c.bf16 %v424, %v423
      %v452 = vpack.c.bf16 %v426, %v425
      %v453 = vpack.c.bf16 %v428, %v427
      %v454 = vpack.c.bf16 %v430, %v429
      %v455 = vpack.c.bf16 %v432, %v431
      %v456 = vpack.c.bf16 %v434, %v433
      %v457 = vpack.c.bf16 %v436, %v435
      %v458 = vpack.c.bf16 %v438, %v437
      %v459 = vpack.c.bf16 %v440, %v439
      %v460 = vpack.c.bf16 %v442, %v441
      %v461 = vpack.c.bf16 %v444, %v443
      %v462 = vpack.c.bf16 %v446, %v445
      %v463 = vld [vmem:[%s406] sm:$0xff]
      %v464 = vld [vmem:[%s406 + $0x8] sm:$0xff]
      %v465 = vld [vmem:[%s406 + $0x10] sm:$0xff]
      %v466 = vld [vmem:[%s406 + $0x18] sm:$0xff]
      %v467 = vld [vmem:[%s406 + $0x20] sm:$0xff]
      %v468 = vld [vmem:[%s406 + $0x28] sm:$0xff]
      %v469 = vld [vmem:[%s406 + $0x30] sm:$0xff]
      %v470 = vld [vmem:[%s406 + $0x38] sm:$0xff]
      %v471 = vld [vmem:[%s406 + $0x40] sm:$0xff]
      %v472 = vld [vmem:[%s406 + $0x48] sm:$0xff]
      %v473 = vld [vmem:[%s406 + $0x50] sm:$0xff]
      %v474 = vld [vmem:[%s406 + $0x58] sm:$0xff]
      %v475 = vld [vmem:[%s406 + $0x60] sm:$0xff]
      %v476 = vld [vmem:[%s406 + $0x68] sm:$0xff]
      %v477 = vld [vmem:[%s406 + $0x70] sm:$0xff]
      %v478 = vld [vmem:[%s406 + $0x78] sm:$0xff]
      %v479 = vld [vmem:[%s406 + $0x80] sm:$0xff]
      %v480 = vld [vmem:[%s406 + $0x88] sm:$0xff]
      %v481 = vld [vmem:[%s406 + $0x90] sm:$0xff]
      %v482 = vld [vmem:[%s406 + $0x98] sm:$0xff]
      %v483 = vld [vmem:[%s406 + $0xa0] sm:$0xff]
      %v484 = vld [vmem:[%s406 + $0xa8] sm:$0xff]
      %v485 = vld [vmem:[%s406 + $0xb0] sm:$0xff]
      %v486 = vld [vmem:[%s406 + $0xb8] sm:$0xff]
      %v487 = vld [vmem:[%s406 + $0xc0] sm:$0xff]
      %v488 = vld [vmem:[%s406 + $0xc8] sm:$0xff]
      %v489 = vld [vmem:[%s406 + $0xd0] sm:$0xff]
      %v490 = vld [vmem:[%s406 + $0xd8] sm:$0xff]
      %v491 = vld [vmem:[%s406 + $0xe0] sm:$0xff]
      %v492 = vld [vmem:[%s406 + $0xe8] sm:$0xff]
      %v493 = vld [vmem:[%s406 + $0xf0] sm:$0xff]
      %v494 = vld [vmem:[%s406 + $0xf8] sm:$0xff]
      %v495 = vld [vmem:[%s2] sm:$0xff]
      %v496 = vld [vmem:[%s2 + $0x8] sm:$0x11]
      %v497 = vld [vmem:[%s3] sm:$0x3]
      %499 = vset.pattern.permute.xlu0 0
      %500 = vperm.xlu0 %499, %v463
      %v501 = vpop.permute.xlu0 %500
      %504 = vset.pattern.permute.xlu0 0
      %505 = vperm.xlu0 %504, %v464
      %v506 = vpop.permute.xlu0 %505
      %509 = vset.pattern.permute.xlu0 0
      %510 = vperm.xlu0 %509, %v465
      %v511 = vpop.permute.xlu0 %510
      %514 = vset.pattern.permute.xlu0 0
      %515 = vperm.xlu0 %514, %v466
      %v516 = vpop.permute.xlu0 %515
      %519 = vset.pattern.permute.xlu0 0
      %520 = vperm.xlu0 %519, %v467
      %v521 = vpop.permute.xlu0 %520
      %524 = vset.pattern.permute.xlu0 0
      %525 = vperm.xlu0 %524, %v468
      %v526 = vpop.permute.xlu0 %525
      %529 = vset.pattern.permute.xlu0 0
      %530 = vperm.xlu0 %529, %v469
      %v531 = vpop.permute.xlu0 %530
      %534 = vset.pattern.permute.xlu0 0
      %535 = vperm.xlu0 %534, %v470
      %v536 = vpop.permute.xlu0 %535
      %539 = vset.pattern.permute.xlu0 0
      %540 = vperm.xlu0 %539, %v471
      %v541 = vpop.permute.xlu0 %540
      %544 = vset.pattern.permute.xlu0 0
      %545 = vperm.xlu0 %544, %v472
      %v546 = vpop.permute.xlu0 %545
      %549 = vset.pattern.permute.xlu0 0
      %550 = vperm.xlu0 %549, %v473
      %v551 = vpop.permute.xlu0 %550
      %554 = vset.pattern.permute.xlu0 0
      %555 = vperm.xlu0 %554, %v474
      %v556 = vpop.permute.xlu0 %555
      %559 = vset.pattern.permute.xlu0 0
      %560 = vperm.xlu0 %559, %v475
      %v561 = vpop.permute.xlu0 %560
      %564 = vset.pattern.permute.xlu0 0
      %565 = vperm.xlu0 %564, %v476
      %v566 = vpop.permute.xlu0 %565
      %569 = vset.pattern.permute.xlu0 0
      %570 = vperm.xlu0 %569, %v477
      %v571 = vpop.permute.xlu0 %570
      %574 = vset.pattern.permute.xlu0 0
      %575 = vperm.xlu0 %574, %v478
      %v576 = vpop.permute.xlu0 %575
      %579 = vset.pattern.permute.xlu0 0
      %580 = vperm.xlu0 %579, %v479
      %v581 = vpop.permute.xlu0 %580
      %584 = vset.pattern.permute.xlu0 0
      %585 = vperm.xlu0 %584, %v480
      %v586 = vpop.permute.xlu0 %585
      %589 = vset.pattern.permute.xlu0 0
      %590 = vperm.xlu0 %589, %v481
      %v591 = vpop.permute.xlu0 %590
      %594 = vset.pattern.permute.xlu0 0
      %595 = vperm.xlu0 %594, %v482
      %v596 = vpop.permute.xlu0 %595
      %599 = vset.pattern.permute.xlu0 0
      %600 = vperm.xlu0 %599, %v483
      %v601 = vpop.permute.xlu0 %600
      %604 = vset.pattern.permute.xlu0 0
      %605 = vperm.xlu0 %604, %v484
      %v606 = vpop.permute.xlu0 %605
      %609 = vset.pattern.permute.xlu0 0
      %610 = vperm.xlu0 %609, %v485
      %v611 = vpop.permute.xlu0 %610
      %614 = vset.pattern.permute.xlu0 0
      %615 = vperm.xlu0 %614, %v486
      %v616 = vpop.permute.xlu0 %615
      %619 = vset.pattern.permute.xlu0 0
      %620 = vperm.xlu0 %619, %v487
      %v621 = vpop.permute.xlu0 %620
      %624 = vset.pattern.permute.xlu0 0
      %625 = vperm.xlu0 %624, %v488
      %v626 = vpop.permute.xlu0 %625
      %629 = vset.pattern.permute.xlu0 0
      %630 = vperm.xlu0 %629, %v489
      %v631 = vpop.permute.xlu0 %630
      %634 = vset.pattern.permute.xlu0 0
      %635 = vperm.xlu0 %634, %v490
      %v636 = vpop.permute.xlu0 %635
      %639 = vset.pattern.permute.xlu0 0
      %640 = vperm.xlu0 %639, %v491
      %v641 = vpop.permute.xlu0 %640
      %644 = vset.pattern.permute.xlu0 0
      %645 = vperm.xlu0 %644, %v492
      %v646 = vpop.permute.xlu0 %645
      %649 = vset.pattern.permute.xlu0 0
      %650 = vperm.xlu0 %649, %v493
      %v651 = vpop.permute.xlu0 %650
      %654 = vset.pattern.permute.xlu0 0
      %655 = vperm.xlu0 %654, %v494
      %v656 = vpop.permute.xlu0 %655
      %v659 = vlaneseq
      %v660 = vshrl.u32 %v659, 7
      %v661 = vsub.s32 0, %v660
      %v662 = vrot.slane %v497, %v661
      %v663 = vlaneseq
      %v664 = vshrl.u32 %v663, 7
      %v665 = vsub.s32 1, %v664
      %v666 = vrot.slane %v497, %v665
      %v669 = vmul.f32 %v501, %v662
      %v670 = vmul.f32 %v501, %v666
      %v671 = vmul.f32 %v506, %v662
      %v672 = vmul.f32 %v506, %v666
      %v673 = vmul.f32 %v511, %v662
      %v674 = vmul.f32 %v511, %v666
      %v675 = vmul.f32 %v516, %v662
      %v676 = vmul.f32 %v516, %v666
      %v677 = vmul.f32 %v521, %v662
      %v678 = vmul.f32 %v521, %v666
      %v679 = vmul.f32 %v526, %v662
      %v680 = vmul.f32 %v526, %v666
      %v681 = vmul.f32 %v531, %v662
      %v682 = vmul.f32 %v531, %v666
      %v683 = vmul.f32 %v536, %v662
      %v684 = vmul.f32 %v536, %v666
      %v685 = vmul.f32 %v541, %v662
      %v686 = vmul.f32 %v541, %v666
      %v687 = vmul.f32 %v546, %v662
      %v688 = vmul.f32 %v546, %v666
      %v689 = vmul.f32 %v551, %v662
      %v690 = vmul.f32 %v551, %v666
      %v691 = vmul.f32 %v556, %v662
      %v692 = vmul.f32 %v556, %v666
      %v693 = vmul.f32 %v561, %v662
      %v694 = vmul.f32 %v561, %v666
      %v695 = vmul.f32 %v566, %v662
      %v696 = vmul.f32 %v566, %v666
      %v697 = vmul.f32 %v571, %v662
      %v698 = vmul.f32 %v571, %v666
      %v699 = vmul.f32 %v576, %v662
      %v700 = vmul.f32 %v576, %v666
      %v701 = vmul.f32 %v581, %v662
      %v702 = vmul.f32 %v581, %v666
      %v703 = vmul.f32 %v586, %v662
      %v704 = vmul.f32 %v586, %v666
      %v705 = vmul.f32 %v591, %v662
      %v706 = vmul.f32 %v591, %v666
      %v707 = vmul.f32 %v596, %v662
      %v708 = vmul.f32 %v596, %v666
      %v709 = vmul.f32 %v601, %v662
      %v710 = vmul.f32 %v601, %v666
      %v711 = vmul.f32 %v606, %v662
      %v712 = vmul.f32 %v606, %v666
      %v713 = vmul.f32 %v611, %v662
      %v714 = vmul.f32 %v611, %v666
      %v715 = vmul.f32 %v616, %v662
      %v716 = vmul.f32 %v616, %v666
      %v717 = vmul.f32 %v621, %v662
      %v718 = vmul.f32 %v621, %v666
      %v719 = vmul.f32 %v626, %v662
      %v720 = vmul.f32 %v626, %v666
      %v721 = vmul.f32 %v631, %v662
      %v722 = vmul.f32 %v631, %v666
      %v723 = vmul.f32 %v636, %v662
      %v724 = vmul.f32 %v636, %v666
      %v725 = vmul.f32 %v641, %v662
      %v726 = vmul.f32 %v641, %v666
      %v727 = vmul.f32 %v646, %v662
      %v728 = vmul.f32 %v646, %v666
      %v729 = vmul.f32 %v651, %v662
      %v730 = vmul.f32 %v651, %v666
      %v731 = vmul.f32 %v656, %v662
      %v732 = vmul.f32 %v656, %v666
      %v735 = vunpack.c.l.b16 %v495
      %v736 = vunpack.c.h.b16 %v495
      %v737 = vunpack.c.l.b16 %v496
      %v738 = vunpack.c.h.b16 %v496
      %v739 = vpack.c.b16 %v737, %v735
      %v740 = vpack.c.b16 %v738, %v736
      %vm741 = vcmask 80896
      %v743 = vsel %vm741, %v447, 0
      %v746 = vsel %vm741, %v448, 0
      %v749 = vsel %vm741, %v449, 0
      %v752 = vsel %vm741, %v450, 0
      %v755 = vsel %vm741, %v451, 0
      %v758 = vsel %vm741, %v452, 0
      %v761 = vsel %vm741, %v453, 0
      %v764 = vsel %vm741, %v454, 0
      %v767 = vsel %vm741, %v455, 0
      %v770 = vsel %vm741, %v456, 0
      %v773 = vsel %vm741, %v457, 0
      %v776 = vsel %vm741, %v458, 0
      %v779 = vsel %vm741, %v459, 0
      %v782 = vsel %vm741, %v460, 0
      %v785 = vsel %vm741, %v461, 0
      %v788 = vsel %vm741, %v462, 0
      %vm790 = vcmask 1044480
      %v792 = vsel %vm790, %v739, 0
      %v795 = vsel %vm790, %v740, 0
      %797 = vmatprep.subr.bf16.mxu0 %v795
      %798 = vmatpush1.bf16.msra.mxu0 %v792
      %799 = vmatprep.subr.bf16.mxu0 0
      %800 = vmatpush1.bf16.msra.mxu0 0
      %801 = vmatprep.subr.bf16.mxu0 0
      %802 = vmatpush1.bf16.msra.mxu0 0
      %803 = vmatprep.subr.bf16.mxu0 0
      %804 = vmatpush1.bf16.msra.mxu0 0
      %805 = vmatprep.subr.bf16.mxu0 0
      %806 = vmatpush1.bf16.msra.mxu0 0
      %807 = vmatprep.subr.bf16.mxu0 0
      %808 = vmatpush1.bf16.msra.mxu0 0
      %809 = vmatprep.subr.bf16.mxu0 0
      %810 = vmatpush1.bf16.msra.mxu0 0
      %811 = vmatprep.subr.bf16.mxu0 0
      %812 = vmatpush1.bf16.msra.mxu0 0
      %813 = vmatprep.subr.bf16.mxu0 0
      %814 = vmatpush1.bf16.msra.mxu0 0
      %815 = vmatprep.subr.bf16.mxu0 0
      %816 = vmatpush1.bf16.msra.mxu0 0
      %817 = vmatprep.subr.bf16.mxu0 0
      %818 = vmatpush1.bf16.msra.mxu0 0
      %819 = vmatprep.subr.bf16.mxu0 0
      %820 = vmatpush1.bf16.msra.mxu0 0
      %821 = vmatprep.subr.bf16.mxu0 0
      %822 = vmatpush1.bf16.msra.mxu0 0
      %823 = vmatprep.subr.bf16.mxu0 0
      %824 = vmatpush1.bf16.msra.mxu0 0
      %825 = vmatprep.subr.bf16.mxu0 0
      %826 = vmatpush1.bf16.msra.mxu0 0
      %827 = vmatprep.subr.bf16.mxu0 0
      %828 = vmatpush1.bf16.msra.mxu0 0
      %829 = vmatprep.mubr.bf16.mxu0 0
      %830 = vmatmul.mubr.bf16.gmra.mrb[0].mxu0 %v743
      %v831 = vpop.f32.mrb[0].mxu0
      %v832 = vadd.f32 %v669, %v831
      %v833 = vpop.f32.mrb[0].mxu0
      %v834 = vadd.f32 %v670, %v833
      %v835 = vpop.f32.mrb[0].mxu0
      %v836 = vadd.f32 %v671, %v835
      %v837 = vpop.f32.mrb[0].mxu0
      %v838 = vadd.f32 %v672, %v837
      %839 = vmatprep.mubr.bf16.mxu0 0
      %840 = vmatmul.mubr.bf16.gmra.mrb[0].mxu0 %v746
      %v841 = vpop.f32.mrb[0].mxu0
      %v842 = vadd.f32 %v673, %v841
      %v843 = vpop.f32.mrb[0].mxu0
      %v844 = vadd.f32 %v674, %v843
      %v845 = vpop.f32.mrb[0].mxu0
      %v846 = vadd.f32 %v675, %v845
      %v847 = vpop.f32.mrb[0].mxu0
      %v848 = vadd.f32 %v676, %v847
      %849 = vmatprep.mubr.bf16.mxu0 0
      %850 = vmatmul.mubr.bf16.gmra.mrb[0].mxu0 %v749
      %v851 = vpop.f32.mrb[0].mxu0
      %v852 = vadd.f32 %v677, %v851
      %v853 = vpop.f32.mrb[0].mxu0
      %v854 = vadd.f32 %v678, %v853
      %v855 = vpop.f32.mrb[0].mxu0
      %v856 = vadd.f32 %v679, %v855
      %v857 = vpop.f32.mrb[0].mxu0
      %v858 = vadd.f32 %v680, %v857
      %859 = vmatprep.mubr.bf16.mxu0 0
      %860 = vmatmul.mubr.bf16.gmra.mrb[0].mxu0 %v752
      %v861 = vpop.f32.mrb[0].mxu0
      %v862 = vadd.f32 %v681, %v861
      %v863 = vpop.f32.mrb[0].mxu0
      %v864 = vadd.f32 %v682, %v863
      %v865 = vpop.f32.mrb[0].mxu0
      %v866 = vadd.f32 %v683, %v865
      %v867 = vpop.f32.mrb[0].mxu0
      %v868 = vadd.f32 %v684, %v867
      %869 = vmatprep.mubr.bf16.mxu0 0
      %870 = vmatmul.mubr.bf16.gmra.mrb[0].mxu0 %v755
      %v871 = vpop.f32.mrb[0].mxu0
      %v872 = vadd.f32 %v685, %v871
      %v873 = vpop.f32.mrb[0].mxu0
      %v874 = vadd.f32 %v686, %v873
      %v875 = vpop.f32.mrb[0].mxu0
      %v876 = vadd.f32 %v687, %v875
      %v877 = vpop.f32.mrb[0].mxu0
      %v878 = vadd.f32 %v688, %v877
      %879 = vmatprep.mubr.bf16.mxu0 0
      %880 = vmatmul.mubr.bf16.gmra.mrb[0].mxu0 %v758
      %v881 = vpop.f32.mrb[0].mxu0
      %v882 = vadd.f32 %v689, %v881
      %v883 = vpop.f32.mrb[0].mxu0
      %v884 = vadd.f32 %v690, %v883
      %v885 = vpop.f32.mrb[0].mxu0
      %v886 = vadd.f32 %v691, %v885
      %v887 = vpop.f32.mrb[0].mxu0
      %v888 = vadd.f32 %v692, %v887
      %889 = vmatprep.mubr.bf16.mxu0 0
      %890 = vmatmul.mubr.bf16.gmra.mrb[0].mxu0 %v761
      %v891 = vpop.f32.mrb[0].mxu0
      %v892 = vadd.f32 %v693, %v891
      %v893 = vpop.f32.mrb[0].mxu0
      %v894 = vadd.f32 %v694, %v893
      %v895 = vpop.f32.mrb[0].mxu0
      %v896 = vadd.f32 %v695, %v895
      %v897 = vpop.f32.mrb[0].mxu0
      %v898 = vadd.f32 %v696, %v897
      %899 = vmatprep.mubr.bf16.mxu0 0
      %900 = vmatmul.mubr.bf16.gmra.mrb[0].mxu0 %v764
      %v901 = vpop.f32.mrb[0].mxu0
      %v902 = vadd.f32 %v697, %v901
      %v903 = vpop.f32.mrb[0].mxu0
      %v904 = vadd.f32 %v698, %v903
      %v905 = vpop.f32.mrb[0].mxu0
      %v906 = vadd.f32 %v699, %v905
      %v907 = vpop.f32.mrb[0].mxu0
      %v908 = vadd.f32 %v700, %v907
      %909 = vmatprep.mubr.bf16.mxu0 0
      %910 = vmatmul.mubr.bf16.gmra.mrb[0].mxu0 %v767
      %v911 = vpop.f32.mrb[0].mxu0
      %v912 = vadd.f32 %v701, %v911
      %v913 = vpop.f32.mrb[0].mxu0
      %v914 = vadd.f32 %v702, %v913
      %v915 = vpop.f32.mrb[0].mxu0
      %v916 = vadd.f32 %v703, %v915
      %v917 = vpop.f32.mrb[0].mxu0
      %v918 = vadd.f32 %v704, %v917
      %919 = vmatprep.mubr.bf16.mxu0 0
      %920 = vmatmul.mubr.bf16.gmra.mrb[0].mxu0 %v770
      %v921 = vpop.f32.mrb[0].mxu0
      %v922 = vadd.f32 %v705, %v921
      %v923 = vpop.f32.mrb[0].mxu0
      %v924 = vadd.f32 %v706, %v923
      %v925 = vpop.f32.mrb[0].mxu0
      %v926 = vadd.f32 %v707, %v925
      %v927 = vpop.f32.mrb[0].mxu0
      %v928 = vadd.f32 %v708, %v927
      %929 = vmatprep.mubr.bf16.mxu0 0
      %930 = vmatmul.mubr.bf16.gmra.mrb[0].mxu0 %v773
      %v931 = vpop.f32.mrb[0].mxu0
      %v932 = vadd.f32 %v709, %v931
      %v933 = vpop.f32.mrb[0].mxu0
      %v934 = vadd.f32 %v710, %v933
      %v935 = vpop.f32.mrb[0].mxu0
      %v936 = vadd.f32 %v711, %v935
      %v937 = vpop.f32.mrb[0].mxu0
      %v938 = vadd.f32 %v712, %v937
      %939 = vmatprep.mubr.bf16.mxu0 0
      %940 = vmatmul.mubr.bf16.gmra.mrb[0].mxu0 %v776
      %v941 = vpop.f32.mrb[0].mxu0
      %v942 = vadd.f32 %v713, %v941
      %v943 = vpop.f32.mrb[0].mxu0
      %v944 = vadd.f32 %v714, %v943
      %v945 = vpop.f32.mrb[0].mxu0
      %v946 = vadd.f32 %v715, %v945
      %v947 = vpop.f32.mrb[0].mxu0
      %v948 = vadd.f32 %v716, %v947
      %949 = vmatprep.mubr.bf16.mxu0 0
      %950 = vmatmul.mubr.bf16.gmra.mrb[0].mxu0 %v779
      %v951 = vpop.f32.mrb[0].mxu0
      %v952 = vadd.f32 %v717, %v951
      %v953 = vpop.f32.mrb[0].mxu0
      %v954 = vadd.f32 %v718, %v953
      %v955 = vpop.f32.mrb[0].mxu0
      %v956 = vadd.f32 %v719, %v955
      %v957 = vpop.f32.mrb[0].mxu0
      %v958 = vadd.f32 %v720, %v957
      %959 = vmatprep.mubr.bf16.mxu0 0
      %960 = vmatmul.mubr.bf16.gmra.mrb[0].mxu0 %v782
      %v961 = vpop.f32.mrb[0].mxu0
      %v962 = vadd.f32 %v721, %v961
      %v963 = vpop.f32.mrb[0].mxu0
      %v964 = vadd.f32 %v722, %v963
      %v965 = vpop.f32.mrb[0].mxu0
      %v966 = vadd.f32 %v723, %v965
      %v967 = vpop.f32.mrb[0].mxu0
      %v968 = vadd.f32 %v724, %v967
      %969 = vmatprep.mubr.bf16.mxu0 0
      %970 = vmatmul.mubr.bf16.gmra.mrb[0].mxu0 %v785
      %v971 = vpop.f32.mrb[0].mxu0
      %v972 = vadd.f32 %v725, %v971
      %v973 = vpop.f32.mrb[0].mxu0
      %v974 = vadd.f32 %v726, %v973
      %v975 = vpop.f32.mrb[0].mxu0
      %v976 = vadd.f32 %v727, %v975
      %v977 = vpop.f32.mrb[0].mxu0
      %v978 = vadd.f32 %v728, %v977
      %979 = vmatprep.mubr.bf16.mxu0 0
      %980 = vmatmul.mubr.bf16.gmra.mrb[0].mxu0 %v788
      %v981 = vpop.f32.mrb[0].mxu0
      %v982 = vadd.f32 %v729, %v981
      %v983 = vpop.f32.mrb[0].mxu0
      %v984 = vadd.f32 %v730, %v983
      %v985 = vpop.f32.mrb[0].mxu0
      %v986 = vadd.f32 %v731, %v985
      %v987 = vpop.f32.mrb[0].mxu0
      %v988 = vadd.f32 %v732, %v987
      %989 = vdwg.mxu0
      %v990 = vld [vmem:[%s4] sm:$0x3]
      %v992 = vlaneseq
      %v993 = vshrl.u32 %v992, 7
      %v994 = vsub.s32 0, %v993
      %v995 = vrot.slane %v990, %v994
      %v996 = vlaneseq
      %v997 = vshrl.u32 %v996, 7
      %v998 = vsub.s32 1, %v997
      %v999 = vrot.slane %v990, %v998
      %v1002 = vadd.f32 %v832, %v995
      %v1003 = vadd.f32 %v834, %v999
      %v1004 = vadd.f32 %v836, %v995
      %v1005 = vadd.f32 %v838, %v999
      %v1006 = vadd.f32 %v842, %v995
      %v1007 = vadd.f32 %v844, %v999
      %v1008 = vadd.f32 %v846, %v995
      %v1009 = vadd.f32 %v848, %v999
      %v1010 = vadd.f32 %v852, %v995
      %v1011 = vadd.f32 %v854, %v999
      %v1012 = vadd.f32 %v856, %v995
      %v1013 = vadd.f32 %v858, %v999
      %v1014 = vadd.f32 %v862, %v995
      %v1015 = vadd.f32 %v864, %v999
      %v1016 = vadd.f32 %v866, %v995
      %v1017 = vadd.f32 %v868, %v999
      %v1018 = vadd.f32 %v872, %v995
      %v1019 = vadd.f32 %v874, %v999
      %v1020 = vadd.f32 %v876, %v995
      %v1021 = vadd.f32 %v878, %v999
      %v1022 = vadd.f32 %v882, %v995
      %v1023 = vadd.f32 %v884, %v999
      %v1024 = vadd.f32 %v886, %v995
      %v1025 = vadd.f32 %v888, %v999
      %v1026 = vadd.f32 %v892, %v995
      %v1027 = vadd.f32 %v894, %v999
      %v1028 = vadd.f32 %v896, %v995
      %v1029 = vadd.f32 %v898, %v999
      %v1030 = vadd.f32 %v902, %v995
      %v1031 = vadd.f32 %v904, %v999
      %v1032 = vadd.f32 %v906, %v995
      %v1033 = vadd.f32 %v908, %v999
      %v1034 = vadd.f32 %v912, %v995
      %v1035 = vadd.f32 %v914, %v999
      %v1036 = vadd.f32 %v916, %v995
      %v1037 = vadd.f32 %v918, %v999
      %v1038 = vadd.f32 %v922, %v995
      %v1039 = vadd.f32 %v924, %v999
      %v1040 = vadd.f32 %v926, %v995
      %v1041 = vadd.f32 %v928, %v999
      %v1042 = vadd.f32 %v932, %v995
      %v1043 = vadd.f32 %v934, %v999
      %v1044 = vadd.f32 %v936, %v995
      %v1045 = vadd.f32 %v938, %v999
      %v1046 = vadd.f32 %v942, %v995
      %v1047 = vadd.f32 %v944, %v999
      %v1048 = vadd.f32 %v946, %v995
      %v1049 = vadd.f32 %v948, %v999
      %v1050 = vadd.f32 %v952, %v995
      %v1051 = vadd.f32 %v954, %v999
      %v1052 = vadd.f32 %v956, %v995
      %v1053 = vadd.f32 %v958, %v999
      %v1054 = vadd.f32 %v962, %v995
      %v1055 = vadd.f32 %v964, %v999
      %v1056 = vadd.f32 %v966, %v995
      %v1057 = vadd.f32 %v968, %v999
      %v1058 = vadd.f32 %v972, %v995
      %v1059 = vadd.f32 %v974, %v999
      %v1060 = vadd.f32 %v976, %v995
      %v1061 = vadd.f32 %v978, %v999
      %v1062 = vadd.f32 %v982, %v995
      %v1063 = vadd.f32 %v984, %v999
      %v1064 = vadd.f32 %v986, %v995
      %v1065 = vadd.f32 %v988, %v999
      %v1066 = vmax.f32 %v1002, 0.0
      %v1067 = vmax.f32 %v1003, 0.0
      %v1068 = vmax.f32 %v1004, 0.0
      %v1069 = vmax.f32 %v1005, 0.0
      %v1070 = vmax.f32 %v1006, 0.0
      %v1071 = vmax.f32 %v1007, 0.0
      %v1072 = vmax.f32 %v1008, 0.0
      %v1073 = vmax.f32 %v1009, 0.0
      %v1074 = vmax.f32 %v1010, 0.0
      %v1075 = vmax.f32 %v1011, 0.0
      %v1076 = vmax.f32 %v1012, 0.0
      %v1077 = vmax.f32 %v1013, 0.0
      %v1078 = vmax.f32 %v1014, 0.0
      %v1079 = vmax.f32 %v1015, 0.0
      %v1080 = vmax.f32 %v1016, 0.0
      %v1081 = vmax.f32 %v1017, 0.0
      %v1082 = vmax.f32 %v1018, 0.0
      %v1083 = vmax.f32 %v1019, 0.0
      %v1084 = vmax.f32 %v1020, 0.0
      %v1085 = vmax.f32 %v1021, 0.0
      %v1086 = vmax.f32 %v1022, 0.0
      %v1087 = vmax.f32 %v1023, 0.0
      %v1088 = vmax.f32 %v1024, 0.0
      %v1089 = vmax.f32 %v1025, 0.0
      %v1090 = vmax.f32 %v1026, 0.0
      %v1091 = vmax.f32 %v1027, 0.0
      %v1092 = vmax.f32 %v1028, 0.0
      %v1093 = vmax.f32 %v1029, 0.0
      %v1094 = vmax.f32 %v1030, 0.0
      %v1095 = vmax.f32 %v1031, 0.0
      %v1096 = vmax.f32 %v1032, 0.0
      %v1097 = vmax.f32 %v1033, 0.0
      %v1098 = vmax.f32 %v1034, 0.0
      %v1099 = vmax.f32 %v1035, 0.0
      %v1100 = vmax.f32 %v1036, 0.0
      %v1101 = vmax.f32 %v1037, 0.0
      %v1102 = vmax.f32 %v1038, 0.0
      %v1103 = vmax.f32 %v1039, 0.0
      %v1104 = vmax.f32 %v1040, 0.0
      %v1105 = vmax.f32 %v1041, 0.0
      %v1106 = vmax.f32 %v1042, 0.0
      %v1107 = vmax.f32 %v1043, 0.0
      %v1108 = vmax.f32 %v1044, 0.0
      %v1109 = vmax.f32 %v1045, 0.0
      %v1110 = vmax.f32 %v1046, 0.0
      %v1111 = vmax.f32 %v1047, 0.0
      %v1112 = vmax.f32 %v1048, 0.0
      %v1113 = vmax.f32 %v1049, 0.0
      %v1114 = vmax.f32 %v1050, 0.0
      %v1115 = vmax.f32 %v1051, 0.0
      %v1116 = vmax.f32 %v1052, 0.0
      %v1117 = vmax.f32 %v1053, 0.0
      %v1118 = vmax.f32 %v1054, 0.0
      %v1119 = vmax.f32 %v1055, 0.0
      %v1120 = vmax.f32 %v1056, 0.0
      %v1121 = vmax.f32 %v1057, 0.0
      %v1122 = vmax.f32 %v1058, 0.0
      %v1123 = vmax.f32 %v1059, 0.0
      %v1124 = vmax.f32 %v1060, 0.0
      %v1125 = vmax.f32 %v1061, 0.0
      %v1126 = vmax.f32 %v1062, 0.0
      %v1127 = vmax.f32 %v1063, 0.0
      %v1128 = vmax.f32 %v1064, 0.0
      %v1129 = vmax.f32 %v1065, 0.0
      %v1130 = vpack.c.bf16 %v1068, %v1066
      %v1131 = vpack.c.bf16 %v1069, %v1067
      %v1132 = vpack.c.bf16 %v1072, %v1070
      %v1133 = vpack.c.bf16 %v1073, %v1071
      %v1134 = vpack.c.bf16 %v1076, %v1074
      %v1135 = vpack.c.bf16 %v1077, %v1075
      %v1136 = vpack.c.bf16 %v1080, %v1078
      %v1137 = vpack.c.bf16 %v1081, %v1079
      %v1138 = vpack.c.bf16 %v1084, %v1082
      %v1139 = vpack.c.bf16 %v1085, %v1083
      %v1140 = vpack.c.bf16 %v1088, %v1086
      %v1141 = vpack.c.bf16 %v1089, %v1087
      %v1142 = vpack.c.bf16 %v1092, %v1090
      %v1143 = vpack.c.bf16 %v1093, %v1091
      %v1144 = vpack.c.bf16 %v1096, %v1094
      %v1145 = vpack.c.bf16 %v1097, %v1095
      %v1146 = vpack.c.bf16 %v1100, %v1098
      %v1147 = vpack.c.bf16 %v1101, %v1099
      %v1148 = vpack.c.bf16 %v1104, %v1102
      %v1149 = vpack.c.bf16 %v1105, %v1103
      %v1150 = vpack.c.bf16 %v1108, %v1106
      %v1151 = vpack.c.bf16 %v1109, %v1107
      %v1152 = vpack.c.bf16 %v1112, %v1110
      %v1153 = vpack.c.bf16 %v1113, %v1111
      %v1154 = vpack.c.bf16 %v1116, %v1114
      %v1155 = vpack.c.bf16 %v1117, %v1115
      %v1156 = vpack.c.bf16 %v1120, %v1118
      %v1157 = vpack.c.bf16 %v1121, %v1119
      %v1158 = vpack.c.bf16 %v1124, %v1122
      %v1159 = vpack.c.bf16 %v1125, %v1123
      %v1160 = vpack.c.bf16 %v1128, %v1126
      %v1161 = vpack.c.bf16 %v1129, %v1127
      %v1162 = vld [vmem:[%s5] sm:$0xff]
      %v1163 = vld [vmem:[%s5 + $0x8] sm:$0xff]
      %v1164 = vld [vmem:[%s5 + $0x10] sm:$0xff]
      %v1165 = vld [vmem:[%s5 + $0x18] sm:$0xff]
      %v1166 = vld [vmem:[%s5 + $0x20] sm:$0xff]
      %v1167 = vld [vmem:[%s5 + $0x28] sm:$0xff]
      %v1168 = vld [vmem:[%s5 + $0x30] sm:$0xff]
      %v1169 = vld [vmem:[%s5 + $0x38] sm:$0xff]
      %v1170 = vld [vmem:[%s5 + $0x40] sm:$0xff]
      %v1171 = vld [vmem:[%s5 + $0x48] sm:$0xff]
      %v1172 = vld [vmem:[%s5 + $0x50] sm:$0xff]
      %v1173 = vld [vmem:[%s5 + $0x58] sm:$0xff]
      %v1174 = vld [vmem:[%s5 + $0x60] sm:$0xff]
      %v1175 = vld [vmem:[%s5 + $0x68] sm:$0xff]
      %v1176 = vld [vmem:[%s5 + $0x70] sm:$0xff]
      %v1177 = vld [vmem:[%s5 + $0x78] sm:$0xff]
      %v1178 = vld [vmem:[%s5 + $0x80] sm:$0xff]
      %v1179 = vld [vmem:[%s5 + $0x88] sm:$0xff]
      %v1180 = vld [vmem:[%s5 + $0x90] sm:$0xff]
      %v1181 = vld [vmem:[%s5 + $0x98] sm:$0xff]
      %v1182 = vld [vmem:[%s5 + $0xa0] sm:$0xff]
      %v1183 = vld [vmem:[%s5 + $0xa8] sm:$0xff]
      %v1184 = vld [vmem:[%s5 + $0xb0] sm:$0xff]
      %v1185 = vld [vmem:[%s5 + $0xb8] sm:$0xff]
      %v1186 = vld [vmem:[%s5 + $0xc0] sm:$0xff]
      %v1187 = vld [vmem:[%s5 + $0xc8] sm:$0xff]
      %v1188 = vld [vmem:[%s5 + $0xd0] sm:$0xff]
      %v1189 = vld [vmem:[%s5 + $0xd8] sm:$0xff]
      %v1190 = vld [vmem:[%s5 + $0xe0] sm:$0xff]
      %v1191 = vld [vmem:[%s5 + $0xe8] sm:$0xff]
      %v1192 = vld [vmem:[%s5 + $0xf0] sm:$0xff]
      %v1193 = vld [vmem:[%s5 + $0xf8] sm:$0xff]
      %v1194 = vld [vmem:[%s6] sm:$0x3]
      %v1196 = vlaneseq
      %v1197 = vshrl.u32 %v1196, 7
      %v1198 = vsub.s32 0, %v1197
      %v1199 = vrot.slane %v1194, %v1198
      %v1200 = vlaneseq
      %v1201 = vshrl.u32 %v1200, 7
      %v1202 = vsub.s32 1, %v1201
      %v1203 = vrot.slane %v1194, %v1202
      %v1238 = vunpack.c.l.b16 %v1162
      %v1239 = vunpack.c.h.b16 %v1162
      %v1240 = vunpack.c.l.b16 %v1163
      %v1241 = vunpack.c.h.b16 %v1163
      %v1242 = vunpack.c.l.b16 %v1164
      %v1243 = vunpack.c.h.b16 %v1164
      %v1244 = vunpack.c.l.b16 %v1165
      %v1245 = vunpack.c.h.b16 %v1165
      %v1246 = vunpack.c.l.b16 %v1166
      %v1247 = vunpack.c.h.b16 %v1166
      %v1248 = vunpack.c.l.b16 %v1167
      %v1249 = vunpack.c.h.b16 %v1167
      %v1250 = vunpack.c.l.b16 %v1168
      %v1251 = vunpack.c.h.b16 %v1168
      %v1252 = vunpack.c.l.b16 %v1169
      %v1253 = vunpack.c.h.b16 %v1169
      %v1254 = vunpack.c.l.b16 %v1170
      %v1255 = vunpack.c.h.b16 %v1170
      %v1256 = vunpack.c.l.b16 %v1171
      %v1257 = vunpack.c.h.b16 %v1171
      %v1258 = vunpack.c.l.b16 %v1172
      %v1259 = vunpack.c.h.b16 %v1172
      %v1260 = vunpack.c.l.b16 %v1173
      %v1261 = vunpack.c.h.b16 %v1173
      %v1262 = vunpack.c.l.b16 %v1174
      %v1263 = vunpack.c.h.b16 %v1174
      %v1264 = vunpack.c.l.b16 %v1175
      %v1265 = vunpack.c.h.b16 %v1175
      %v1266 = vunpack.c.l.b16 %v1176
      %v1267 = vunpack.c.h.b16 %v1176
      %v1268 = vunpack.c.l.b16 %v1177
      %v1269 = vunpack.c.h.b16 %v1177
      %v1270 = vunpack.c.l.b16 %v1178
      %v1271 = vunpack.c.h.b16 %v1178
      %v1272 = vunpack.c.l.b16 %v1179
      %v1273 = vunpack.c.h.b16 %v1179
      %v1274 = vunpack.c.l.b16 %v1180
      %v1275 = vunpack.c.h.b16 %v1180
      %v1276 = vunpack.c.l.b16 %v1181
      %v1277 = vunpack.c.h.b16 %v1181
      %v1278 = vunpack.c.l.b16 %v1182
      %v1279 = vunpack.c.h.b16 %v1182
      %v1280 = vunpack.c.l.b16 %v1183
      %v1281 = vunpack.c.h.b16 %v1183
      %v1282 = vunpack.c.l.b16 %v1184
      %v1283 = vunpack.c.h.b16 %v1184
      %v1284 = vunpack.c.l.b16 %v1185
      %v1285 = vunpack.c.h.b16 %v1185
      %v1286 = vunpack.c.l.b16 %v1186
      %v1287 = vunpack.c.h.b16 %v1186
      %v1288 = vunpack.c.l.b16 %v1187
      %v1289 = vunpack.c.h.b16 %v1187
      %v1290 = vunpack.c.l.b16 %v1188
      %v1291 = vunpack.c.h.b16 %v1188
      %v1292 = vunpack.c.l.b16 %v1189
      %v1293 = vunpack.c.h.b16 %v1189
      %v1294 = vunpack.c.l.b16 %v1190
      %v1295 = vunpack.c.h.b16 %v1190
      %v1296 = vunpack.c.l.b16 %v1191
      %v1297 = vunpack.c.h.b16 %v1191
      %v1298 = vunpack.c.l.b16 %v1192
      %v1299 = vunpack.c.h.b16 %v1192
      %v1300 = vunpack.c.l.b16 %v1193
      %v1301 = vunpack.c.h.b16 %v1193
      %v1302 = vpack.c.b16 %v1240, %v1238
      %v1303 = vpack.c.b16 %v1241, %v1239
      %v1304 = vpack.c.b16 %v1244, %v1242
      %v1305 = vpack.c.b16 %v1245, %v1243
      %v1306 = vpack.c.b16 %v1248, %v1246
      %v1307 = vpack.c.b16 %v1249, %v1247
      %v1308 = vpack.c.b16 %v1252, %v1250
      %v1309 = vpack.c.b16 %v1253, %v1251
      %v1310 = vpack.c.b16 %v1256, %v1254
      %v1311 = vpack.c.b16 %v1257, %v1255
      %v1312 = vpack.c.b16 %v1260, %v1258
      %v1313 = vpack.c.b16 %v1261, %v1259
      %v1314 = vpack.c.b16 %v1264, %v1262
      %v1315 = vpack.c.b16 %v1265, %v1263
      %v1316 = vpack.c.b16 %v1268, %v1266
      %v1317 = vpack.c.b16 %v1269, %v1267
      %v1318 = vpack.c.b16 %v1272, %v1270
      %v1319 = vpack.c.b16 %v1273, %v1271
      %v1320 = vpack.c.b16 %v1276, %v1274
      %v1321 = vpack.c.b16 %v1277, %v1275
      %v1322 = vpack.c.b16 %v1280, %v1278
      %v1323 = vpack.c.b16 %v1281, %v1279
      %v1324 = vpack.c.b16 %v1284, %v1282
      %v1325 = vpack.c.b16 %v1285, %v1283
      %v1326 = vpack.c.b16 %v1288, %v1286
      %v1327 = vpack.c.b16 %v1289, %v1287
      %v1328 = vpack.c.b16 %v1292, %v1290
      %v1329 = vpack.c.b16 %v1293, %v1291
      %v1330 = vpack.c.b16 %v1296, %v1294
      %v1331 = vpack.c.b16 %v1297, %v1295
      %v1332 = vpack.c.b16 %v1300, %v1298
      %v1333 = vpack.c.b16 %v1301, %v1299
      %1366 = vmatprep.subr.bf16.mxu0 %v1303
      %1367 = vmatpush1.bf16.msra.mxu0 %v1302
      %1368 = vmatprep.subr.bf16.mxu0 %v1305
      %1369 = vmatpush1.bf16.msra.mxu0 %v1304
      %1370 = vmatprep.subr.bf16.mxu0 %v1307
      %1371 = vmatpush1.bf16.msra.mxu0 %v1306
      %1372 = vmatprep.subr.bf16.mxu0 %v1309
      %1373 = vmatpush1.bf16.msra.mxu0 %v1308
      %1374 = vmatprep.subr.bf16.mxu0 %v1311
      %1375 = vmatpush1.bf16.msra.mxu0 %v1310
      %1376 = vmatprep.subr.bf16.mxu0 %v1313
      %1377 = vmatpush1.bf16.msra.mxu0 %v1312
      %1378 = vmatprep.subr.bf16.mxu0 %v1315
      %1379 = vmatpush1.bf16.msra.mxu0 %v1314
      %1380 = vmatprep.subr.bf16.mxu0 %v1317
      %1381 = vmatpush1.bf16.msra.mxu0 %v1316
      %1382 = vmatprep.subr.bf16.mxu0 %v1319
      %1383 = vmatpush1.bf16.msra.mxu0 %v1318
      %1384 = vmatprep.subr.bf16.mxu0 %v1321
      %1385 = vmatpush1.bf16.msra.mxu0 %v1320
      %1386 = vmatprep.subr.bf16.mxu0 %v1323
      %1387 = vmatpush1.bf16.msra.mxu0 %v1322
      %1388 = vmatprep.subr.bf16.mxu0 %v1325
      %1389 = vmatpush1.bf16.msra.mxu0 %v1324
      %1390 = vmatprep.subr.bf16.mxu0 %v1327
      %1391 = vmatpush1.bf16.msra.mxu0 %v1326
      %1392 = vmatprep.subr.bf16.mxu0 %v1329
      %1393 = vmatpush1.bf16.msra.mxu0 %v1328
      %1394 = vmatprep.subr.bf16.mxu0 %v1331
      %1395 = vmatpush1.bf16.msra.mxu0 %v1330
      %1396 = vmatprep.subr.bf16.mxu0 %v1333
      %1397 = vmatpush1.bf16.msra.mxu0 %v1332
      %1398 = vmatprep.mubr.bf16.mxu0 %v1131
      %1399 = vmatmul.mubr.bf16.gmra.mrb[0].mxu0 %v1130
      %v1400 = vpop.f32.mrb[0].mxu0
      %v1401 = vadd.f32 %v1199, %v1400
      %v1402 = vpop.f32.mrb[0].mxu0
      %v1403 = vadd.f32 %v1203, %v1402
      %v1404 = vpop.f32.mrb[0].mxu0
      %v1405 = vadd.f32 %v1199, %v1404
      %v1406 = vpop.f32.mrb[0].mxu0
      %v1407 = vadd.f32 %v1203, %v1406
      %1408 = vmatprep.mubr.bf16.mxu0 %v1133
      %1409 = vmatmul.mubr.bf16.gmra.mrb[0].mxu0 %v1132
      %v1410 = vpop.f32.mrb[0].mxu0
      %v1411 = vadd.f32 %v1199, %v1410
      %v1412 = vpop.f32.mrb[0].mxu0
      %v1413 = vadd.f32 %v1203, %v1412
      %v1414 = vpop.f32.mrb[0].mxu0
      %v1415 = vadd.f32 %v1199, %v1414
      %v1416 = vpop.f32.mrb[0].mxu0
      %v1417 = vadd.f32 %v1203, %v1416
      %1418 = vmatprep.mubr.bf16.mxu0 %v1135
      %1419 = vmatmul.mubr.bf16.gmra.mrb[0].mxu0 %v1134
      %v1420 = vpop.f32.mrb[0].mxu0
      %v1421 = vadd.f32 %v1199, %v1420
      %v1422 = vpop.f32.mrb[0].mxu0
      %v1423 = vadd.f32 %v1203, %v1422
      %v1424 = vpop.f32.mrb[0].mxu0
      %v1425 = vadd.f32 %v1199, %v1424
      %v1426 = vpop.f32.mrb[0].mxu0
      %v1427 = vadd.f32 %v1203, %v1426
      %1428 = vmatprep.mubr.bf16.mxu0 %v1137
      %1429 = vmatmul.mubr.bf16.gmra.mrb[0].mxu0 %v1136
      %v1430 = vpop.f32.mrb[0].mxu0
      %v1431 = vadd.f32 %v1199, %v1430
      %v1432 = vpop.f32.mrb[0].mxu0
      %v1433 = vadd.f32 %v1203, %v1432
      %v1434 = vpop.f32.mrb[0].mxu0
      %v1435 = vadd.f32 %v1199, %v1434
      %v1436 = vpop.f32.mrb[0].mxu0
      %v1437 = vadd.f32 %v1203, %v1436
      %1438 = vmatprep.mubr.bf16.mxu0 %v1139
      %1439 = vmatmul.mubr.bf16.gmra.mrb[0].mxu0 %v1138
      %v1440 = vpop.f32.mrb[0].mxu0
      %v1441 = vadd.f32 %v1199, %v1440
      %v1442 = vpop.f32.mrb[0].mxu0
      %v1443 = vadd.f32 %v1203, %v1442
      %v1444 = vpop.f32.mrb[0].mxu0
      %v1445 = vadd.f32 %v1199, %v1444
      %v1446 = vpop.f32.mrb[0].mxu0
      %v1447 = vadd.f32 %v1203, %v1446
      %1448 = vmatprep.mubr.bf16.mxu0 %v1141
      %1449 = vmatmul.mubr.bf16.gmra.mrb[0].mxu0 %v1140
      %v1450 = vpop.f32.mrb[0].mxu0
      %v1451 = vadd.f32 %v1199, %v1450
      %v1452 = vpop.f32.mrb[0].mxu0
      %v1453 = vadd.f32 %v1203, %v1452
      %v1454 = vpop.f32.mrb[0].mxu0
      %v1455 = vadd.f32 %v1199, %v1454
      %v1456 = vpop.f32.mrb[0].mxu0
      %v1457 = vadd.f32 %v1203, %v1456
      %1458 = vmatprep.mubr.bf16.mxu0 %v1143
      %1459 = vmatmul.mubr.bf16.gmra.mrb[0].mxu0 %v1142
      %v1460 = vpop.f32.mrb[0].mxu0
      %v1461 = vadd.f32 %v1199, %v1460
      %v1462 = vpop.f32.mrb[0].mxu0
      %v1463 = vadd.f32 %v1203, %v1462
      %v1464 = vpop.f32.mrb[0].mxu0
      %v1465 = vadd.f32 %v1199, %v1464
      %v1466 = vpop.f32.mrb[0].mxu0
      %v1467 = vadd.f32 %v1203, %v1466
      %1468 = vmatprep.mubr.bf16.mxu0 %v1145
      %1469 = vmatmul.mubr.bf16.gmra.mrb[0].mxu0 %v1144
      %v1470 = vpop.f32.mrb[0].mxu0
      %v1471 = vadd.f32 %v1199, %v1470
      %v1472 = vpop.f32.mrb[0].mxu0
      %v1473 = vadd.f32 %v1203, %v1472
      %v1474 = vpop.f32.mrb[0].mxu0
      %v1475 = vadd.f32 %v1199, %v1474
      %v1476 = vpop.f32.mrb[0].mxu0
      %v1477 = vadd.f32 %v1203, %v1476
      %1478 = vmatprep.mubr.bf16.mxu0 %v1147
      %1479 = vmatmul.mubr.bf16.gmra.mrb[0].mxu0 %v1146
      %v1480 = vpop.f32.mrb[0].mxu0
      %v1481 = vadd.f32 %v1199, %v1480
      %v1482 = vpop.f32.mrb[0].mxu0
      %v1483 = vadd.f32 %v1203, %v1482
      %v1484 = vpop.f32.mrb[0].mxu0
      %v1485 = vadd.f32 %v1199, %v1484
      %v1486 = vpop.f32.mrb[0].mxu0
      %v1487 = vadd.f32 %v1203, %v1486
      %1488 = vmatprep.mubr.bf16.mxu0 %v1149
      %1489 = vmatmul.mubr.bf16.gmra.mrb[0].mxu0 %v1148
      %v1490 = vpop.f32.mrb[0].mxu0
      %v1491 = vadd.f32 %v1199, %v1490
      %v1492 = vpop.f32.mrb[0].mxu0
      %v1493 = vadd.f32 %v1203, %v1492
      %v1494 = vpop.f32.mrb[0].mxu0
      %v1495 = vadd.f32 %v1199, %v1494
      %v1496 = vpop.f32.mrb[0].mxu0
      %v1497 = vadd.f32 %v1203, %v1496
      %1498 = vmatprep.mubr.bf16.mxu0 %v1151
      %1499 = vmatmul.mubr.bf16.gmra.mrb[0].mxu0 %v1150
      %v1500 = vpop.f32.mrb[0].mxu0
      %v1501 = vadd.f32 %v1199, %v1500
      %v1502 = vpop.f32.mrb[0].mxu0
      %v1503 = vadd.f32 %v1203, %v1502
      %v1504 = vpop.f32.mrb[0].mxu0
      %v1505 = vadd.f32 %v1199, %v1504
      %v1506 = vpop.f32.mrb[0].mxu0
      %v1507 = vadd.f32 %v1203, %v1506
      %1508 = vmatprep.mubr.bf16.mxu0 %v1153
      %1509 = vmatmul.mubr.bf16.gmra.mrb[0].mxu0 %v1152
      %v1510 = vpop.f32.mrb[0].mxu0
      %v1511 = vadd.f32 %v1199, %v1510
      %v1512 = vpop.f32.mrb[0].mxu0
      %v1513 = vadd.f32 %v1203, %v1512
      %v1514 = vpop.f32.mrb[0].mxu0
      %v1515 = vadd.f32 %v1199, %v1514
      %v1516 = vpop.f32.mrb[0].mxu0
      %v1517 = vadd.f32 %v1203, %v1516
      %1518 = vmatprep.mubr.bf16.mxu0 %v1155
      %1519 = vmatmul.mubr.bf16.gmra.mrb[0].mxu0 %v1154
      %v1520 = vpop.f32.mrb[0].mxu0
      %v1521 = vadd.f32 %v1199, %v1520
      %v1522 = vpop.f32.mrb[0].mxu0
      %v1523 = vadd.f32 %v1203, %v1522
      %v1524 = vpop.f32.mrb[0].mxu0
      %v1525 = vadd.f32 %v1199, %v1524
      %v1526 = vpop.f32.mrb[0].mxu0
      %v1527 = vadd.f32 %v1203, %v1526
      %1528 = vmatprep.mubr.bf16.mxu0 %v1157
      %1529 = vmatmul.mubr.bf16.gmra.mrb[0].mxu0 %v1156
      %v1530 = vpop.f32.mrb[0].mxu0
      %v1531 = vadd.f32 %v1199, %v1530
      %v1532 = vpop.f32.mrb[0].mxu0
      %v1533 = vadd.f32 %v1203, %v1532
      %v1534 = vpop.f32.mrb[0].mxu0
      %v1535 = vadd.f32 %v1199, %v1534
      %v1536 = vpop.f32.mrb[0].mxu0
      %v1537 = vadd.f32 %v1203, %v1536
      %1538 = vmatprep.mubr.bf16.mxu0 %v1159
      %1539 = vmatmul.mubr.bf16.gmra.mrb[0].mxu0 %v1158
      %v1540 = vpop.f32.mrb[0].mxu0
      %v1541 = vadd.f32 %v1199, %v1540
      %v1542 = vpop.f32.mrb[0].mxu0
      %v1543 = vadd.f32 %v1203, %v1542
      %v1544 = vpop.f32.mrb[0].mxu0
      %v1545 = vadd.f32 %v1199, %v1544
      %v1546 = vpop.f32.mrb[0].mxu0
      %v1547 = vadd.f32 %v1203, %v1546
      %1548 = vmatprep.mubr.bf16.mxu0 %v1161
      %1549 = vmatmul.mubr.bf16.gmra.mrb[0].mxu0 %v1160
      %v1550 = vpop.f32.mrb[0].mxu0
      %v1551 = vadd.f32 %v1199, %v1550
      %v1552 = vpop.f32.mrb[0].mxu0
      %v1553 = vadd.f32 %v1203, %v1552
      %v1554 = vpop.f32.mrb[0].mxu0
      %v1555 = vadd.f32 %v1199, %v1554
      %v1556 = vpop.f32.mrb[0].mxu0
      %v1557 = vadd.f32 %v1203, %v1556
      %1558 = vdwg.mxu0
      %v1559 = vmax.f32 %v1401, 0.0
      %v1560 = vmax.f32 %v1403, 0.0
      %v1561 = vmax.f32 %v1405, 0.0
      %v1562 = vmax.f32 %v1407, 0.0
      %v1563 = vmax.f32 %v1411, 0.0
      %v1564 = vmax.f32 %v1413, 0.0
      %v1565 = vmax.f32 %v1415, 0.0
      %v1566 = vmax.f32 %v1417, 0.0
      %v1567 = vmax.f32 %v1421, 0.0
      %v1568 = vmax.f32 %v1423, 0.0
      %v1569 = vmax.f32 %v1425, 0.0
      %v1570 = vmax.f32 %v1427, 0.0
      %v1571 = vmax.f32 %v1431, 0.0
      %v1572 = vmax.f32 %v1433, 0.0
      %v1573 = vmax.f32 %v1435, 0.0
      %v1574 = vmax.f32 %v1437, 0.0
      %v1575 = vmax.f32 %v1441, 0.0
      %v1576 = vmax.f32 %v1443, 0.0
      %v1577 = vmax.f32 %v1445, 0.0
      %v1578 = vmax.f32 %v1447, 0.0
      %v1579 = vmax.f32 %v1451, 0.0
      %v1580 = vmax.f32 %v1453, 0.0
      %v1581 = vmax.f32 %v1455, 0.0
      %v1582 = vmax.f32 %v1457, 0.0
      %v1583 = vmax.f32 %v1461, 0.0
      %v1584 = vmax.f32 %v1463, 0.0
      %v1585 = vmax.f32 %v1465, 0.0
      %v1586 = vmax.f32 %v1467, 0.0
      %v1587 = vmax.f32 %v1471, 0.0
      %v1588 = vmax.f32 %v1473, 0.0
      %v1589 = vmax.f32 %v1475, 0.0
      %v1590 = vmax.f32 %v1477, 0.0
      %v1591 = vmax.f32 %v1481, 0.0
      %v1592 = vmax.f32 %v1483, 0.0
      %v1593 = vmax.f32 %v1485, 0.0
      %v1594 = vmax.f32 %v1487, 0.0
      %v1595 = vmax.f32 %v1491, 0.0
      %v1596 = vmax.f32 %v1493, 0.0
      %v1597 = vmax.f32 %v1495, 0.0
      %v1598 = vmax.f32 %v1497, 0.0
      %v1599 = vmax.f32 %v1501, 0.0
      %v1600 = vmax.f32 %v1503, 0.0
      %v1601 = vmax.f32 %v1505, 0.0
      %v1602 = vmax.f32 %v1507, 0.0
      %v1603 = vmax.f32 %v1511, 0.0
      %v1604 = vmax.f32 %v1513, 0.0
      %v1605 = vmax.f32 %v1515, 0.0
      %v1606 = vmax.f32 %v1517, 0.0
      %v1607 = vmax.f32 %v1521, 0.0
      %v1608 = vmax.f32 %v1523, 0.0
      %v1609 = vmax.f32 %v1525, 0.0
      %v1610 = vmax.f32 %v1527, 0.0
      %v1611 = vmax.f32 %v1531, 0.0
      %v1612 = vmax.f32 %v1533, 0.0
      %v1613 = vmax.f32 %v1535, 0.0
      %v1614 = vmax.f32 %v1537, 0.0
      %v1615 = vmax.f32 %v1541, 0.0
      %v1616 = vmax.f32 %v1543, 0.0
      %v1617 = vmax.f32 %v1545, 0.0
      %v1618 = vmax.f32 %v1547, 0.0
      %v1619 = vmax.f32 %v1551, 0.0
      %v1620 = vmax.f32 %v1553, 0.0
      %v1621 = vmax.f32 %v1555, 0.0
      %v1622 = vmax.f32 %v1557, 0.0
      %v1623 = vpack.c.bf16 %v1561, %v1559
      %v1624 = vpack.c.bf16 %v1562, %v1560
      %v1625 = vpack.c.bf16 %v1565, %v1563
      %v1626 = vpack.c.bf16 %v1566, %v1564
      %v1627 = vpack.c.bf16 %v1569, %v1567
      %v1628 = vpack.c.bf16 %v1570, %v1568
      %v1629 = vpack.c.bf16 %v1573, %v1571
      %v1630 = vpack.c.bf16 %v1574, %v1572
      %v1631 = vpack.c.bf16 %v1577, %v1575
      %v1632 = vpack.c.bf16 %v1578, %v1576
      %v1633 = vpack.c.bf16 %v1581, %v1579
      %v1634 = vpack.c.bf16 %v1582, %v1580
      %v1635 = vpack.c.bf16 %v1585, %v1583
      %v1636 = vpack.c.bf16 %v1586, %v1584
      %v1637 = vpack.c.bf16 %v1589, %v1587
      %v1638 = vpack.c.bf16 %v1590, %v1588
      %v1639 = vpack.c.bf16 %v1593, %v1591
      %v1640 = vpack.c.bf16 %v1594, %v1592
      %v1641 = vpack.c.bf16 %v1597, %v1595
      %v1642 = vpack.c.bf16 %v1598, %v1596
      %v1643 = vpack.c.bf16 %v1601, %v1599
      %v1644 = vpack.c.bf16 %v1602, %v1600
      %v1645 = vpack.c.bf16 %v1605, %v1603
      %v1646 = vpack.c.bf16 %v1606, %v1604
      %v1647 = vpack.c.bf16 %v1609, %v1607
      %v1648 = vpack.c.bf16 %v1610, %v1608
      %v1649 = vpack.c.bf16 %v1613, %v1611
      %v1650 = vpack.c.bf16 %v1614, %v1612
      %v1651 = vpack.c.bf16 %v1617, %v1615
      %v1652 = vpack.c.bf16 %v1618, %v1616
      %v1653 = vpack.c.bf16 %v1621, %v1619
      %v1654 = vpack.c.bf16 %v1622, %v1620
      %v1655 = vld [vmem:[%s7] sm:$0xff]
      %v1656 = vld [vmem:[%s7 + $0x8] sm:$0xff]
      %v1657 = vld [vmem:[%s7 + $0x10] sm:$0xff]
      %v1658 = vld [vmem:[%s7 + $0x18] sm:$0xff]
      %v1659 = vld [vmem:[%s7 + $0x20] sm:$0xff]
      %v1660 = vld [vmem:[%s7 + $0x28] sm:$0xff]
      %v1661 = vld [vmem:[%s7 + $0x30] sm:$0xff]
      %v1662 = vld [vmem:[%s7 + $0x38] sm:$0xff]
      %v1663 = vld [vmem:[%s7 + $0x40] sm:$0xff]
      %v1664 = vld [vmem:[%s7 + $0x48] sm:$0xff]
      %v1665 = vld [vmem:[%s7 + $0x50] sm:$0xff]
      %v1666 = vld [vmem:[%s7 + $0x58] sm:$0xff]
      %v1667 = vld [vmem:[%s7 + $0x60] sm:$0xff]
      %v1668 = vld [vmem:[%s7 + $0x68] sm:$0xff]
      %v1669 = vld [vmem:[%s7 + $0x70] sm:$0xff]
      %v1670 = vld [vmem:[%s7 + $0x78] sm:$0xff]
      %v1671 = vld [vmem:[%s7 + $0x80] sm:$0xff]
      %v1672 = vld [vmem:[%s7 + $0x88] sm:$0xff]
      %v1673 = vld [vmem:[%s7 + $0x90] sm:$0xff]
      %v1674 = vld [vmem:[%s7 + $0x98] sm:$0xff]
      %v1675 = vld [vmem:[%s7 + $0xa0] sm:$0xff]
      %v1676 = vld [vmem:[%s7 + $0xa8] sm:$0xff]
      %v1677 = vld [vmem:[%s7 + $0xb0] sm:$0xff]
      %v1678 = vld [vmem:[%s7 + $0xb8] sm:$0xff]
      %v1679 = vld [vmem:[%s7 + $0xc0] sm:$0xff]
      %v1680 = vld [vmem:[%s7 + $0xc8] sm:$0xff]
      %v1681 = vld [vmem:[%s7 + $0xd0] sm:$0xff]
      %v1682 = vld [vmem:[%s7 + $0xd8] sm:$0xff]
      %v1683 = vld [vmem:[%s7 + $0xe0] sm:$0xff]
      %v1684 = vld [vmem:[%s7 + $0xe8] sm:$0xff]
      %v1685 = vld [vmem:[%s7 + $0xf0] sm:$0xff]
      %v1686 = vld [vmem:[%s7 + $0xf8] sm:$0xff]
      %v1687 = vld [vmem:[%s8] sm:$0x3]
      %v1689 = vlaneseq
      %v1690 = vshrl.u32 %v1689, 7
      %v1691 = vsub.s32 0, %v1690
      %v1692 = vrot.slane %v1687, %v1691
      %v1693 = vlaneseq
      %v1694 = vshrl.u32 %v1693, 7
      %v1695 = vsub.s32 1, %v1694
      %v1696 = vrot.slane %v1687, %v1695
      %v1731 = vunpack.c.l.b16 %v1655
      %v1732 = vunpack.c.h.b16 %v1655
      %v1733 = vunpack.c.l.b16 %v1656
      %v1734 = vunpack.c.h.b16 %v1656
      %v1735 = vunpack.c.l.b16 %v1657
      %v1736 = vunpack.c.h.b16 %v1657
      %v1737 = vunpack.c.l.b16 %v1658
      %v1738 = vunpack.c.h.b16 %v1658
      %v1739 = vunpack.c.l.b16 %v1659
      %v1740 = vunpack.c.h.b16 %v1659
      %v1741 = vunpack.c.l.b16 %v1660
      %v1742 = vunpack.c.h.b16 %v1660
      %v1743 = vunpack.c.l.b16 %v1661
      %v1744 = vunpack.c.h.b16 %v1661
      %v1745 = vunpack.c.l.b16 %v1662
      %v1746 = vunpack.c.h.b16 %v1662
      %v1747 = vunpack.c.l.b16 %v1663
      %v1748 = vunpack.c.h.b16 %v1663
      %v1749 = vunpack.c.l.b16 %v1664
      %v1750 = vunpack.c.h.b16 %v1664
      %v1751 = vunpack.c.l.b16 %v1665
      %v1752 = vunpack.c.h.b16 %v1665
      %v1753 = vunpack.c.l.b16 %v1666
      %v1754 = vunpack.c.h.b16 %v1666
      %v1755 = vunpack.c.l.b16 %v1667
      %v1756 = vunpack.c.h.b16 %v1667
      %v1757 = vunpack.c.l.b16 %v1668
      %v1758 = vunpack.c.h.b16 %v1668
      %v1759 = vunpack.c.l.b16 %v1669
      %v1760 = vunpack.c.h.b16 %v1669
      %v1761 = vunpack.c.l.b16 %v1670
      %v1762 = vunpack.c.h.b16 %v1670
      %v1763 = vunpack.c.l.b16 %v1671
      %v1764 = vunpack.c.h.b16 %v1671
      %v1765 = vunpack.c.l.b16 %v1672
      %v1766 = vunpack.c.h.b16 %v1672
      %v1767 = vunpack.c.l.b16 %v1673
      %v1768 = vunpack.c.h.b16 %v1673
      %v1769 = vunpack.c.l.b16 %v1674
      %v1770 = vunpack.c.h.b16 %v1674
      %v1771 = vunpack.c.l.b16 %v1675
      %v1772 = vunpack.c.h.b16 %v1675
      %v1773 = vunpack.c.l.b16 %v1676
      %v1774 = vunpack.c.h.b16 %v1676
      %v1775 = vunpack.c.l.b16 %v1677
      %v1776 = vunpack.c.h.b16 %v1677
      %v1777 = vunpack.c.l.b16 %v1678
      %v1778 = vunpack.c.h.b16 %v1678
      %v1779 = vunpack.c.l.b16 %v1679
      %v1780 = vunpack.c.h.b16 %v1679
      %v1781 = vunpack.c.l.b16 %v1680
      %v1782 = vunpack.c.h.b16 %v1680
      %v1783 = vunpack.c.l.b16 %v1681
      %v1784 = vunpack.c.h.b16 %v1681
      %v1785 = vunpack.c.l.b16 %v1682
      %v1786 = vunpack.c.h.b16 %v1682
      %v1787 = vunpack.c.l.b16 %v1683
      %v1788 = vunpack.c.h.b16 %v1683
      %v1789 = vunpack.c.l.b16 %v1684
      %v1790 = vunpack.c.h.b16 %v1684
      %v1791 = vunpack.c.l.b16 %v1685
      %v1792 = vunpack.c.h.b16 %v1685
      %v1793 = vunpack.c.l.b16 %v1686
      %v1794 = vunpack.c.h.b16 %v1686
      %v1795 = vpack.c.b16 %v1733, %v1731
      %v1796 = vpack.c.b16 %v1734, %v1732
      %v1797 = vpack.c.b16 %v1737, %v1735
      %v1798 = vpack.c.b16 %v1738, %v1736
      %v1799 = vpack.c.b16 %v1741, %v1739
      %v1800 = vpack.c.b16 %v1742, %v1740
      %v1801 = vpack.c.b16 %v1745, %v1743
      %v1802 = vpack.c.b16 %v1746, %v1744
      %v1803 = vpack.c.b16 %v1749, %v1747
      %v1804 = vpack.c.b16 %v1750, %v1748
      %v1805 = vpack.c.b16 %v1753, %v1751
      %v1806 = vpack.c.b16 %v1754, %v1752
      %v1807 = vpack.c.b16 %v1757, %v1755
      %v1808 = vpack.c.b16 %v1758, %v1756
      %v1809 = vpack.c.b16 %v1761, %v1759
      %v1810 = vpack.c.b16 %v1762, %v1760
      %v1811 = vpack.c.b16 %v1765, %v1763
      %v1812 = vpack.c.b16 %v1766, %v1764
      %v1813 = vpack.c.b16 %v1769, %v1767
      %v1814 = vpack.c.b16 %v1770, %v1768
      %v1815 = vpack.c.b16 %v1773, %v1771
      %v1816 = vpack.c.b16 %v1774, %v1772
      %v1817 = vpack.c.b16 %v1777, %v1775
      %v1818 = vpack.c.b16 %v1778, %v1776
      %v1819 = vpack.c.b16 %v1781, %v1779
      %v1820 = vpack.c.b16 %v1782, %v1780
      %v1821 = vpack.c.b16 %v1785, %v1783
      %v1822 = vpack.c.b16 %v1786, %v1784
      %v1823 = vpack.c.b16 %v1789, %v1787
      %v1824 = vpack.c.b16 %v1790, %v1788
      %v1825 = vpack.c.b16 %v1793, %v1791
      %v1826 = vpack.c.b16 %v1794, %v1792
      %1859 = vmatprep.subr.bf16.mxu0 %v1796
      %1860 = vmatpush1.bf16.msra.mxu0 %v1795
      %1861 = vmatprep.subr.bf16.mxu0 %v1798
      %1862 = vmatpush1.bf16.msra.mxu0 %v1797
      %1863 = vmatprep.subr.bf16.mxu0 %v1800
      %1864 = vmatpush1.bf16.msra.mxu0 %v1799
      %1865 = vmatprep.subr.bf16.mxu0 %v1802
      %1866 = vmatpush1.bf16.msra.mxu0 %v1801
      %1867 = vmatprep.subr.bf16.mxu0 %v1804
      %1868 = vmatpush1.bf16.msra.mxu0 %v1803
      %1869 = vmatprep.subr.bf16.mxu0 %v1806
      %1870 = vmatpush1.bf16.msra.mxu0 %v1805
      %1871 = vmatprep.subr.bf16.mxu0 %v1808
      %1872 = vmatpush1.bf16.msra.mxu0 %v1807
      %1873 = vmatprep.subr.bf16.mxu0 %v1810
      %1874 = vmatpush1.bf16.msra.mxu0 %v1809
      %1875 = vmatprep.subr.bf16.mxu0 %v1812
      %1876 = vmatpush1.bf16.msra.mxu0 %v1811
      %1877 = vmatprep.subr.bf16.mxu0 %v1814
      %1878 = vmatpush1.bf16.msra.mxu0 %v1813
      %1879 = vmatprep.subr.bf16.mxu0 %v1816
      %1880 = vmatpush1.bf16.msra.mxu0 %v1815
      %1881 = vmatprep.subr.bf16.mxu0 %v1818
      %1882 = vmatpush1.bf16.msra.mxu0 %v1817
      %1883 = vmatprep.subr.bf16.mxu0 %v1820
      %1884 = vmatpush1.bf16.msra.mxu0 %v1819
      %1885 = vmatprep.subr.bf16.mxu0 %v1822
      %1886 = vmatpush1.bf16.msra.mxu0 %v1821
      %1887 = vmatprep.subr.bf16.mxu0 %v1824
      %1888 = vmatpush1.bf16.msra.mxu0 %v1823
      %1889 = vmatprep.subr.bf16.mxu0 %v1826
      %1890 = vmatpush1.bf16.msra.mxu0 %v1825
      %1891 = vmatprep.mubr.bf16.mxu0 %v1624
      %1892 = vmatmul.mubr.bf16.gmra.mrb[0].mxu0 %v1623
      %v1893 = vpop.f32.mrb[0].mxu0
      %v1894 = vadd.f32 %v1692, %v1893
      %v1895 = vpop.f32.mrb[0].mxu0
      %v1896 = vadd.f32 %v1696, %v1895
      %v1897 = vpop.f32.mrb[0].mxu0
      %v1898 = vadd.f32 %v1692, %v1897
      %v1899 = vpop.f32.mrb[0].mxu0
      %v1900 = vadd.f32 %v1696, %v1899
      %1901 = vmatprep.mubr.bf16.mxu0 %v1626
      %1902 = vmatmul.mubr.bf16.gmra.mrb[0].mxu0 %v1625
      %v1903 = vpop.f32.mrb[0].mxu0
      %v1904 = vadd.f32 %v1692, %v1903
      %v1905 = vpop.f32.mrb[0].mxu0
      %v1906 = vadd.f32 %v1696, %v1905
      %v1907 = vpop.f32.mrb[0].mxu0
      %v1908 = vadd.f32 %v1692, %v1907
      %v1909 = vpop.f32.mrb[0].mxu0
      %v1910 = vadd.f32 %v1696, %v1909
      %1911 = vmatprep.mubr.bf16.mxu0 %v1628
      %1912 = vmatmul.mubr.bf16.gmra.mrb[0].mxu0 %v1627
      %v1913 = vpop.f32.mrb[0].mxu0
      %v1914 = vadd.f32 %v1692, %v1913
      %v1915 = vpop.f32.mrb[0].mxu0
      %v1916 = vadd.f32 %v1696, %v1915
      %v1917 = vpop.f32.mrb[0].mxu0
      %v1918 = vadd.f32 %v1692, %v1917
      %v1919 = vpop.f32.mrb[0].mxu0
      %v1920 = vadd.f32 %v1696, %v1919
      %1921 = vmatprep.mubr.bf16.mxu0 %v1630
      %1922 = vmatmul.mubr.bf16.gmra.mrb[0].mxu0 %v1629
      %v1923 = vpop.f32.mrb[0].mxu0
      %v1924 = vadd.f32 %v1692, %v1923
      %v1925 = vpop.f32.mrb[0].mxu0
      %v1926 = vadd.f32 %v1696, %v1925
      %v1927 = vpop.f32.mrb[0].mxu0
      %v1928 = vadd.f32 %v1692, %v1927
      %v1929 = vpop.f32.mrb[0].mxu0
      %v1930 = vadd.f32 %v1696, %v1929
      %1931 = vmatprep.mubr.bf16.mxu0 %v1632
      %1932 = vmatmul.mubr.bf16.gmra.mrb[0].mxu0 %v1631
      %v1933 = vpop.f32.mrb[0].mxu0
      %v1934 = vadd.f32 %v1692, %v1933
      %v1935 = vpop.f32.mrb[0].mxu0
      %v1936 = vadd.f32 %v1696, %v1935
      %v1937 = vpop.f32.mrb[0].mxu0
      %v1938 = vadd.f32 %v1692, %v1937
      %v1939 = vpop.f32.mrb[0].mxu0
      %v1940 = vadd.f32 %v1696, %v1939
      %1941 = vmatprep.mubr.bf16.mxu0 %v1634
      %1942 = vmatmul.mubr.bf16.gmra.mrb[0].mxu0 %v1633
      %v1943 = vpop.f32.mrb[0].mxu0
      %v1944 = vadd.f32 %v1692, %v1943
      %v1945 = vpop.f32.mrb[0].mxu0
      %v1946 = vadd.f32 %v1696, %v1945
      %v1947 = vpop.f32.mrb[0].mxu0
      %v1948 = vadd.f32 %v1692, %v1947
      %v1949 = vpop.f32.mrb[0].mxu0
      %v1950 = vadd.f32 %v1696, %v1949
      %1951 = vmatprep.mubr.bf16.mxu0 %v1636
      %1952 = vmatmul.mubr.bf16.gmra.mrb[0].mxu0 %v1635
      %v1953 = vpop.f32.mrb[0].mxu0
      %v1954 = vadd.f32 %v1692, %v1953
      %v1955 = vpop.f32.mrb[0].mxu0
      %v1956 = vadd.f32 %v1696, %v1955
      %v1957 = vpop.f32.mrb[0].mxu0
      %v1958 = vadd.f32 %v1692, %v1957
      %v1959 = vpop.f32.mrb[0].mxu0
      %v1960 = vadd.f32 %v1696, %v1959
      %1961 = vmatprep.mubr.bf16.mxu0 %v1638
      %1962 = vmatmul.mubr.bf16.gmra.mrb[0].mxu0 %v1637
      %v1963 = vpop.f32.mrb[0].mxu0
      %v1964 = vadd.f32 %v1692, %v1963
      %v1965 = vpop.f32.mrb[0].mxu0
      %v1966 = vadd.f32 %v1696, %v1965
      %v1967 = vpop.f32.mrb[0].mxu0
      %v1968 = vadd.f32 %v1692, %v1967
      %v1969 = vpop.f32.mrb[0].mxu0
      %v1970 = vadd.f32 %v1696, %v1969
      %1971 = vmatprep.mubr.bf16.mxu0 %v1640
      %1972 = vmatmul.mubr.bf16.gmra.mrb[0].mxu0 %v1639
      %v1973 = vpop.f32.mrb[0].mxu0
      %v1974 = vadd.f32 %v1692, %v1973
      %v1975 = vpop.f32.mrb[0].mxu0
      %v1976 = vadd.f32 %v1696, %v1975
      %v1977 = vpop.f32.mrb[0].mxu0
      %v1978 = vadd.f32 %v1692, %v1977
      %v1979 = vpop.f32.mrb[0].mxu0
      %v1980 = vadd.f32 %v1696, %v1979
      %1981 = vmatprep.mubr.bf16.mxu0 %v1642
      %1982 = vmatmul.mubr.bf16.gmra.mrb[0].mxu0 %v1641
      %v1983 = vpop.f32.mrb[0].mxu0
      %v1984 = vadd.f32 %v1692, %v1983
      %v1985 = vpop.f32.mrb[0].mxu0
      %v1986 = vadd.f32 %v1696, %v1985
      %v1987 = vpop.f32.mrb[0].mxu0
      %v1988 = vadd.f32 %v1692, %v1987
      %v1989 = vpop.f32.mrb[0].mxu0
      %v1990 = vadd.f32 %v1696, %v1989
      %1991 = vmatprep.mubr.bf16.mxu0 %v1644
      %1992 = vmatmul.mubr.bf16.gmra.mrb[0].mxu0 %v1643
      %v1993 = vpop.f32.mrb[0].mxu0
      %v1994 = vadd.f32 %v1692, %v1993
      %v1995 = vpop.f32.mrb[0].mxu0
      %v1996 = vadd.f32 %v1696, %v1995
      %v1997 = vpop.f32.mrb[0].mxu0
      %v1998 = vadd.f32 %v1692, %v1997
      %v1999 = vpop.f32.mrb[0].mxu0
      %v2000 = vadd.f32 %v1696, %v1999
      %2001 = vmatprep.mubr.bf16.mxu0 %v1646
      %2002 = vmatmul.mubr.bf16.gmra.mrb[0].mxu0 %v1645
      %v2003 = vpop.f32.mrb[0].mxu0
      %v2004 = vadd.f32 %v1692, %v2003
      %v2005 = vpop.f32.mrb[0].mxu0
      %v2006 = vadd.f32 %v1696, %v2005
      %v2007 = vpop.f32.mrb[0].mxu0
      %v2008 = vadd.f32 %v1692, %v2007
      %v2009 = vpop.f32.mrb[0].mxu0
      %v2010 = vadd.f32 %v1696, %v2009
      %2011 = vmatprep.mubr.bf16.mxu0 %v1648
      %2012 = vmatmul.mubr.bf16.gmra.mrb[0].mxu0 %v1647
      %v2013 = vpop.f32.mrb[0].mxu0
      %v2014 = vadd.f32 %v1692, %v2013
      %v2015 = vpop.f32.mrb[0].mxu0
      %v2016 = vadd.f32 %v1696, %v2015
      %v2017 = vpop.f32.mrb[0].mxu0
      %v2018 = vadd.f32 %v1692, %v2017
      %v2019 = vpop.f32.mrb[0].mxu0
      %v2020 = vadd.f32 %v1696, %v2019
      %2021 = vmatprep.mubr.bf16.mxu0 %v1650
      %2022 = vmatmul.mubr.bf16.gmra.mrb[0].mxu0 %v1649
      %v2023 = vpop.f32.mrb[0].mxu0
      %v2024 = vadd.f32 %v1692, %v2023
      %v2025 = vpop.f32.mrb[0].mxu0
      %v2026 = vadd.f32 %v1696, %v2025
      %v2027 = vpop.f32.mrb[0].mxu0
      %v2028 = vadd.f32 %v1692, %v2027
      %v2029 = vpop.f32.mrb[0].mxu0
      %v2030 = vadd.f32 %v1696, %v2029
      %2031 = vmatprep.mubr.bf16.mxu0 %v1652
      %2032 = vmatmul.mubr.bf16.gmra.mrb[0].mxu0 %v1651
      %v2033 = vpop.f32.mrb[0].mxu0
      %v2034 = vadd.f32 %v1692, %v2033
      %v2035 = vpop.f32.mrb[0].mxu0
      %v2036 = vadd.f32 %v1696, %v2035
      %v2037 = vpop.f32.mrb[0].mxu0
      %v2038 = vadd.f32 %v1692, %v2037
      %v2039 = vpop.f32.mrb[0].mxu0
      %v2040 = vadd.f32 %v1696, %v2039
      %2041 = vmatprep.mubr.bf16.mxu0 %v1654
      %2042 = vmatmul.mubr.bf16.gmra.mrb[0].mxu0 %v1653
      %v2043 = vpop.f32.mrb[0].mxu0
      %v2044 = vadd.f32 %v1692, %v2043
      %v2045 = vpop.f32.mrb[0].mxu0
      %v2046 = vadd.f32 %v1696, %v2045
      %v2047 = vpop.f32.mrb[0].mxu0
      %v2048 = vadd.f32 %v1692, %v2047
      %v2049 = vpop.f32.mrb[0].mxu0
      %v2050 = vadd.f32 %v1696, %v2049
      %2051 = vdwg.mxu0
      %v2052 = vmax.f32 %v1894, 0.0
      %v2053 = vmax.f32 %v1896, 0.0
      %v2054 = vmax.f32 %v1898, 0.0
      %v2055 = vmax.f32 %v1900, 0.0
      %v2056 = vmax.f32 %v1904, 0.0
      %v2057 = vmax.f32 %v1906, 0.0
      %v2058 = vmax.f32 %v1908, 0.0
      %v2059 = vmax.f32 %v1910, 0.0
      %v2060 = vmax.f32 %v1914, 0.0
      %v2061 = vmax.f32 %v1916, 0.0
      %v2062 = vmax.f32 %v1918, 0.0
      %v2063 = vmax.f32 %v1920, 0.0
      %v2064 = vmax.f32 %v1924, 0.0
      %v2065 = vmax.f32 %v1926, 0.0
      %v2066 = vmax.f32 %v1928, 0.0
      %v2067 = vmax.f32 %v1930, 0.0
      %v2068 = vmax.f32 %v1934, 0.0
      %v2069 = vmax.f32 %v1936, 0.0
      %v2070 = vmax.f32 %v1938, 0.0
      %v2071 = vmax.f32 %v1940, 0.0
      %v2072 = vmax.f32 %v1944, 0.0
      %v2073 = vmax.f32 %v1946, 0.0
      %v2074 = vmax.f32 %v1948, 0.0
      %v2075 = vmax.f32 %v1950, 0.0
      %v2076 = vmax.f32 %v1954, 0.0
      %v2077 = vmax.f32 %v1956, 0.0
      %v2078 = vmax.f32 %v1958, 0.0
      %v2079 = vmax.f32 %v1960, 0.0
      %v2080 = vmax.f32 %v1964, 0.0
      %v2081 = vmax.f32 %v1966, 0.0
      %v2082 = vmax.f32 %v1968, 0.0
      %v2083 = vmax.f32 %v1970, 0.0
      %v2084 = vmax.f32 %v1974, 0.0
      %v2085 = vmax.f32 %v1976, 0.0
      %v2086 = vmax.f32 %v1978, 0.0
      %v2087 = vmax.f32 %v1980, 0.0
      %v2088 = vmax.f32 %v1984, 0.0
      %v2089 = vmax.f32 %v1986, 0.0
      %v2090 = vmax.f32 %v1988, 0.0
      %v2091 = vmax.f32 %v1990, 0.0
      %v2092 = vmax.f32 %v1994, 0.0
      %v2093 = vmax.f32 %v1996, 0.0
      %v2094 = vmax.f32 %v1998, 0.0
      %v2095 = vmax.f32 %v2000, 0.0
      %v2096 = vmax.f32 %v2004, 0.0
      %v2097 = vmax.f32 %v2006, 0.0
      %v2098 = vmax.f32 %v2008, 0.0
      %v2099 = vmax.f32 %v2010, 0.0
      %v2100 = vmax.f32 %v2014, 0.0
      %v2101 = vmax.f32 %v2016, 0.0
      %v2102 = vmax.f32 %v2018, 0.0
      %v2103 = vmax.f32 %v2020, 0.0
      %v2104 = vmax.f32 %v2024, 0.0
      %v2105 = vmax.f32 %v2026, 0.0
      %v2106 = vmax.f32 %v2028, 0.0
      %v2107 = vmax.f32 %v2030, 0.0
      %v2108 = vmax.f32 %v2034, 0.0
      %v2109 = vmax.f32 %v2036, 0.0
      %v2110 = vmax.f32 %v2038, 0.0
      %v2111 = vmax.f32 %v2040, 0.0
      %v2112 = vmax.f32 %v2044, 0.0
      %v2113 = vmax.f32 %v2046, 0.0
      %v2114 = vmax.f32 %v2048, 0.0
      %v2115 = vmax.f32 %v2050, 0.0
      %v2116 = vpack.c.bf16 %v2054, %v2052
      %v2117 = vpack.c.bf16 %v2055, %v2053
      %v2118 = vpack.c.bf16 %v2058, %v2056
      %v2119 = vpack.c.bf16 %v2059, %v2057
      %v2120 = vpack.c.bf16 %v2062, %v2060
      %v2121 = vpack.c.bf16 %v2063, %v2061
      %v2122 = vpack.c.bf16 %v2066, %v2064
      %v2123 = vpack.c.bf16 %v2067, %v2065
      %v2124 = vpack.c.bf16 %v2070, %v2068
      %v2125 = vpack.c.bf16 %v2071, %v2069
      %v2126 = vpack.c.bf16 %v2074, %v2072
      %v2127 = vpack.c.bf16 %v2075, %v2073
      %v2128 = vpack.c.bf16 %v2078, %v2076
      %v2129 = vpack.c.bf16 %v2079, %v2077
      %v2130 = vpack.c.bf16 %v2082, %v2080
      %v2131 = vpack.c.bf16 %v2083, %v2081
      %v2132 = vpack.c.bf16 %v2086, %v2084
      %v2133 = vpack.c.bf16 %v2087, %v2085
      %v2134 = vpack.c.bf16 %v2090, %v2088
      %v2135 = vpack.c.bf16 %v2091, %v2089
      %v2136 = vpack.c.bf16 %v2094, %v2092
      %v2137 = vpack.c.bf16 %v2095, %v2093
      %v2138 = vpack.c.bf16 %v2098, %v2096
      %v2139 = vpack.c.bf16 %v2099, %v2097
      %v2140 = vpack.c.bf16 %v2102, %v2100
      %v2141 = vpack.c.bf16 %v2103, %v2101
      %v2142 = vpack.c.bf16 %v2106, %v2104
      %v2143 = vpack.c.bf16 %v2107, %v2105
      %v2144 = vpack.c.bf16 %v2110, %v2108
      %v2145 = vpack.c.bf16 %v2111, %v2109
      %v2146 = vpack.c.bf16 %v2114, %v2112
      %v2147 = vpack.c.bf16 %v2115, %v2113
      %v2148 = vld [vmem:[%s9] sm:$0xf]
      %v2149 = vld [vmem:[%s9 + $0x4] sm:$0xf]
      %v2150 = vld [vmem:[%s9 + $0x8] sm:$0xf]
      %v2151 = vld [vmem:[%s9 + $0xc] sm:$0xf]
      %v2152 = vld [vmem:[%s9 + $0x10] sm:$0xf]
      %v2153 = vld [vmem:[%s9 + $0x14] sm:$0xf]
      %v2154 = vld [vmem:[%s9 + $0x18] sm:$0xf]
      %v2155 = vld [vmem:[%s9 + $0x1c] sm:$0xf]
      %v2156 = vld [vmem:[%s9 + $0x20] sm:$0xf]
      %v2157 = vld [vmem:[%s9 + $0x24] sm:$0xf]
      %v2158 = vld [vmem:[%s9 + $0x28] sm:$0xf]
      %v2159 = vld [vmem:[%s9 + $0x2c] sm:$0xf]
      %v2160 = vld [vmem:[%s9 + $0x30] sm:$0xf]
      %v2161 = vld [vmem:[%s9 + $0x34] sm:$0xf]
      %v2162 = vld [vmem:[%s9 + $0x38] sm:$0xf]
      %v2163 = vld [vmem:[%s9 + $0x3c] sm:$0xf]
      %v2164 = vld [vmem:[%s9 + $0x40] sm:$0xf]
      %v2165 = vld [vmem:[%s9 + $0x44] sm:$0xf]
      %v2166 = vld [vmem:[%s9 + $0x48] sm:$0xf]
      %v2167 = vld [vmem:[%s9 + $0x4c] sm:$0xf]
      %v2168 = vld [vmem:[%s9 + $0x50] sm:$0xf]
      %v2169 = vld [vmem:[%s9 + $0x54] sm:$0xf]
      %v2170 = vld [vmem:[%s9 + $0x58] sm:$0xf]
      %v2171 = vld [vmem:[%s9 + $0x5c] sm:$0xf]
      %v2172 = vld [vmem:[%s9 + $0x60] sm:$0xf]
      %v2173 = vld [vmem:[%s9 + $0x64] sm:$0xf]
      %v2174 = vld [vmem:[%s9 + $0x68] sm:$0xf]
      %v2175 = vld [vmem:[%s9 + $0x6c] sm:$0xf]
      %v2176 = vld [vmem:[%s9 + $0x70] sm:$0xf]
      %v2177 = vld [vmem:[%s9 + $0x74] sm:$0xf]
      %v2178 = vld [vmem:[%s9 + $0x78] sm:$0xf]
      %v2179 = vld [vmem:[%s9 + $0x7c] sm:$0xf]
      %v2180 = vld [vmem:[#allocation2] sm:$0x1]
      %v2182 = vlaneseq
      %v2183 = vshrl.u32 %v2182, 7
      %v2184 = vsub.s32 0, %v2183
      %v2185 = vrot.slane %v2180, %v2184
      %v2219 = vunpack.c.l.b16 %v2148
      %v2220 = vunpack.c.l.b16 %v2149
      %v2221 = vunpack.c.l.b16 %v2150
      %v2222 = vunpack.c.l.b16 %v2151
      %v2223 = vunpack.c.l.b16 %v2152
      %v2224 = vunpack.c.l.b16 %v2153
      %v2225 = vunpack.c.l.b16 %v2154
      %v2226 = vunpack.c.l.b16 %v2155
      %v2227 = vunpack.c.l.b16 %v2156
      %v2228 = vunpack.c.l.b16 %v2157
      %v2229 = vunpack.c.l.b16 %v2158
      %v2230 = vunpack.c.l.b16 %v2159
      %v2231 = vunpack.c.l.b16 %v2160
      %v2232 = vunpack.c.l.b16 %v2161
      %v2233 = vunpack.c.l.b16 %v2162
      %v2234 = vunpack.c.l.b16 %v2163
      %v2235 = vunpack.c.l.b16 %v2164
      %v2236 = vunpack.c.l.b16 %v2165
      %v2237 = vunpack.c.l.b16 %v2166
      %v2238 = vunpack.c.l.b16 %v2167
      %v2239 = vunpack.c.l.b16 %v2168
      %v2240 = vunpack.c.l.b16 %v2169
      %v2241 = vunpack.c.l.b16 %v2170
      %v2242 = vunpack.c.l.b16 %v2171
      %v2243 = vunpack.c.l.b16 %v2172
      %v2244 = vunpack.c.l.b16 %v2173
      %v2245 = vunpack.c.l.b16 %v2174
      %v2246 = vunpack.c.l.b16 %v2175
      %v2247 = vunpack.c.l.b16 %v2176
      %v2248 = vunpack.c.l.b16 %v2177
      %v2249 = vunpack.c.l.b16 %v2178
      %v2250 = vunpack.c.l.b16 %v2179
      %v2251 = vpack.c.b16 %v2220, %v2219
      %v2252 = vpack.c.b16 %v2222, %v2221
      %v2253 = vpack.c.b16 %v2224, %v2223
      %v2254 = vpack.c.b16 %v2226, %v2225
      %v2255 = vpack.c.b16 %v2228, %v2227
      %v2256 = vpack.c.b16 %v2230, %v2229
      %v2257 = vpack.c.b16 %v2232, %v2231
      %v2258 = vpack.c.b16 %v2234, %v2233
      %v2259 = vpack.c.b16 %v2236, %v2235
      %v2260 = vpack.c.b16 %v2238, %v2237
      %v2261 = vpack.c.b16 %v2240, %v2239
      %v2262 = vpack.c.b16 %v2242, %v2241
      %v2263 = vpack.c.b16 %v2244, %v2243
      %v2264 = vpack.c.b16 %v2246, %v2245
      %v2265 = vpack.c.b16 %v2248, %v2247
      %v2266 = vpack.c.b16 %v2250, %v2249
      %2283 = vmatprep.subr.bf16.mxu0 0
      %2284 = vmatpush1.bf16.msra.mxu0 %v2251
      %2285 = vmatprep.subr.bf16.mxu0 0
      %2286 = vmatpush1.bf16.msra.mxu0 %v2252
      %2287 = vmatprep.subr.bf16.mxu0 0
      %2288 = vmatpush1.bf16.msra.mxu0 %v2253
      %2289 = vmatprep.subr.bf16.mxu0 0
      %2290 = vmatpush1.bf16.msra.mxu0 %v2254
      %2291 = vmatprep.subr.bf16.mxu0 0
      %2292 = vmatpush1.bf16.msra.mxu0 %v2255
      %2293 = vmatprep.subr.bf16.mxu0 0
      %2294 = vmatpush1.bf16.msra.mxu0 %v2256
      %2295 = vmatprep.subr.bf16.mxu0 0
      %2296 = vmatpush1.bf16.msra.mxu0 %v2257
      %2297 = vmatprep.subr.bf16.mxu0 0
      %2298 = vmatpush1.bf16.msra.mxu0 %v2258
      %2299 = vmatprep.subr.bf16.mxu0 0
      %2300 = vmatpush1.bf16.msra.mxu0 %v2259
      %2301 = vmatprep.subr.bf16.mxu0 0
      %2302 = vmatpush1.bf16.msra.mxu0 %v2260
      %2303 = vmatprep.subr.bf16.mxu0 0
      %2304 = vmatpush1.bf16.msra.mxu0 %v2261
      %2305 = vmatprep.subr.bf16.mxu0 0
      %2306 = vmatpush1.bf16.msra.mxu0 %v2262
      %2307 = vmatprep.subr.bf16.mxu0 0
      %2308 = vmatpush1.bf16.msra.mxu0 %v2263
      %2309 = vmatprep.subr.bf16.mxu0 0
      %2310 = vmatpush1.bf16.msra.mxu0 %v2264
      %2311 = vmatprep.subr.bf16.mxu0 0
      %2312 = vmatpush1.bf16.msra.mxu0 %v2265
      %2313 = vmatprep.subr.bf16.mxu0 0
      %2314 = vmatpush1.bf16.msra.mxu0 %v2266
      %2315 = vmatprep.mubr.bf16.mxu0 %v2117
      %2316 = vmatmul.mubr.bf16.gmra.mrb[0].mxu0 %v2116
      %v2317 = vpop.f32.mrb[0].mxu0
      %v2318 = vadd.f32 %v2185, %v2317
      %v2319 = vpop.f32.mrb[0].mxu0
      %v2320 = vpop.f32.mrb[0].mxu0
      %v2321 = vadd.f32 %v2185, %v2320
      %v2322 = vpop.f32.mrb[0].mxu0
      %2323 = vmatprep.mubr.bf16.mxu0 %v2119
      %2324 = vmatmul.mubr.bf16.gmra.mrb[0].mxu0 %v2118
      %v2325 = vpop.f32.mrb[0].mxu0
      %v2326 = vadd.f32 %v2185, %v2325
      %v2327 = vpop.f32.mrb[0].mxu0
      %v2328 = vpop.f32.mrb[0].mxu0
      %v2329 = vadd.f32 %v2185, %v2328
      %v2330 = vpop.f32.mrb[0].mxu0
      %2331 = vmatprep.mubr.bf16.mxu0 %v2121
      %2332 = vmatmul.mubr.bf16.gmra.mrb[0].mxu0 %v2120
      %v2333 = vpop.f32.mrb[0].mxu0
      %v2334 = vadd.f32 %v2185, %v2333
      %v2335 = vpop.f32.mrb[0].mxu0
      %v2336 = vpop.f32.mrb[0].mxu0
      %v2337 = vadd.f32 %v2185, %v2336
      %v2338 = vpop.f32.mrb[0].mxu0
      %2339 = vmatprep.mubr.bf16.mxu0 %v2123
      %2340 = vmatmul.mubr.bf16.gmra.mrb[0].mxu0 %v2122
      %v2341 = vpop.f32.mrb[0].mxu0
      %v2342 = vadd.f32 %v2185, %v2341
      %v2343 = vpop.f32.mrb[0].mxu0
      %v2344 = vpop.f32.mrb[0].mxu0
      %v2345 = vadd.f32 %v2185, %v2344
      %v2346 = vpop.f32.mrb[0].mxu0
      %2347 = vmatprep.mubr.bf16.mxu0 %v2125
      %2348 = vmatmul.mubr.bf16.gmra.mrb[0].mxu0 %v2124
      %v2349 = vpop.f32.mrb[0].mxu0
      %v2350 = vadd.f32 %v2185, %v2349
      %v2351 = vpop.f32.mrb[0].mxu0
      %v2352 = vpop.f32.mrb[0].mxu0
      %v2353 = vadd.f32 %v2185, %v2352
      %v2354 = vpop.f32.mrb[0].mxu0
      %2355 = vmatprep.mubr.bf16.mxu0 %v2127
      %2356 = vmatmul.mubr.bf16.gmra.mrb[0].mxu0 %v2126
      %v2357 = vpop.f32.mrb[0].mxu0
      %v2358 = vadd.f32 %v2185, %v2357
      %v2359 = vpop.f32.mrb[0].mxu0
      %v2360 = vpop.f32.mrb[0].mxu0
      %v2361 = vadd.f32 %v2185, %v2360
      %v2362 = vpop.f32.mrb[0].mxu0
      %2363 = vmatprep.mubr.bf16.mxu0 %v2129
      %2364 = vmatmul.mubr.bf16.gmra.mrb[0].mxu0 %v2128
      %v2365 = vpop.f32.mrb[0].mxu0
      %v2366 = vadd.f32 %v2185, %v2365
      %v2367 = vpop.f32.mrb[0].mxu0
      %v2368 = vpop.f32.mrb[0].mxu0
      %v2369 = vadd.f32 %v2185, %v2368
      %v2370 = vpop.f32.mrb[0].mxu0
      %2371 = vmatprep.mubr.bf16.mxu0 %v2131
      %2372 = vmatmul.mubr.bf16.gmra.mrb[0].mxu0 %v2130
      %v2373 = vpop.f32.mrb[0].mxu0
      %v2374 = vadd.f32 %v2185, %v2373
      %v2375 = vpop.f32.mrb[0].mxu0
      %v2376 = vpop.f32.mrb[0].mxu0
      %v2377 = vadd.f32 %v2185, %v2376
      %v2378 = vpop.f32.mrb[0].mxu0
      %2379 = vmatprep.mubr.bf16.mxu0 %v2133
      %2380 = vmatmul.mubr.bf16.gmra.mrb[0].mxu0 %v2132
      %v2381 = vpop.f32.mrb[0].mxu0
      %v2382 = vadd.f32 %v2185, %v2381
      %v2383 = vpop.f32.mrb[0].mxu0
      %v2384 = vpop.f32.mrb[0].mxu0
      %v2385 = vadd.f32 %v2185, %v2384
      %v2386 = vpop.f32.mrb[0].mxu0
      %2387 = vmatprep.mubr.bf16.mxu0 %v2135
      %2388 = vmatmul.mubr.bf16.gmra.mrb[0].mxu0 %v2134
      %v2389 = vpop.f32.mrb[0].mxu0
      %v2390 = vadd.f32 %v2185, %v2389
      %v2391 = vpop.f32.mrb[0].mxu0
      %v2392 = vpop.f32.mrb[0].mxu0
      %v2393 = vadd.f32 %v2185, %v2392
      %v2394 = vpop.f32.mrb[0].mxu0
      %2395 = vmatprep.mubr.bf16.mxu0 %v2137
      %2396 = vmatmul.mubr.bf16.gmra.mrb[0].mxu0 %v2136
      %v2397 = vpop.f32.mrb[0].mxu0
      %v2398 = vadd.f32 %v2185, %v2397
      %v2399 = vpop.f32.mrb[0].mxu0
      %v2400 = vpop.f32.mrb[0].mxu0
      %v2401 = vadd.f32 %v2185, %v2400
      %v2402 = vpop.f32.mrb[0].mxu0
      %2403 = vmatprep.mubr.bf16.mxu0 %v2139
      %2404 = vmatmul.mubr.bf16.gmra.mrb[0].mxu0 %v2138
      %v2405 = vpop.f32.mrb[0].mxu0
      %v2406 = vadd.f32 %v2185, %v2405
      %v2407 = vpop.f32.mrb[0].mxu0
      %v2408 = vpop.f32.mrb[0].mxu0
      %v2409 = vadd.f32 %v2185, %v2408
      %v2410 = vpop.f32.mrb[0].mxu0
      %2411 = vmatprep.mubr.bf16.mxu0 %v2141
      %2412 = vmatmul.mubr.bf16.gmra.mrb[0].mxu0 %v2140
      %v2413 = vpop.f32.mrb[0].mxu0
      %v2414 = vadd.f32 %v2185, %v2413
      %v2415 = vpop.f32.mrb[0].mxu0
      %v2416 = vpop.f32.mrb[0].mxu0
      %v2417 = vadd.f32 %v2185, %v2416
      %v2418 = vpop.f32.mrb[0].mxu0
      %2419 = vmatprep.mubr.bf16.mxu0 %v2143
      %2420 = vmatmul.mubr.bf16.gmra.mrb[0].mxu0 %v2142
      %v2421 = vpop.f32.mrb[0].mxu0
      %v2422 = vadd.f32 %v2185, %v2421
      %v2423 = vpop.f32.mrb[0].mxu0
      %v2424 = vpop.f32.mrb[0].mxu0
      %v2425 = vadd.f32 %v2185, %v2424
      %v2426 = vpop.f32.mrb[0].mxu0
      %2427 = vmatprep.mubr.bf16.mxu0 %v2145
      %2428 = vmatmul.mubr.bf16.gmra.mrb[0].mxu0 %v2144
      %v2429 = vpop.f32.mrb[0].mxu0
      %v2430 = vadd.f32 %v2185, %v2429
      %v2431 = vpop.f32.mrb[0].mxu0
      %v2432 = vpop.f32.mrb[0].mxu0
      %v2433 = vadd.f32 %v2185, %v2432
      %v2434 = vpop.f32.mrb[0].mxu0
      %2435 = vmatprep.mubr.bf16.mxu0 %v2147
      %2436 = vmatmul.mubr.bf16.gmra.mrb[0].mxu0 %v2146
      %v2437 = vpop.f32.mrb[0].mxu0
      %v2438 = vadd.f32 %v2185, %v2437
      %v2439 = vpop.f32.mrb[0].mxu0
      %v2440 = vpop.f32.mrb[0].mxu0
      %v2441 = vadd.f32 %v2185, %v2440
      %v2442 = vpop.f32.mrb[0].mxu0
      %2443 = vdwg.mxu0
      %vm2444 = vcmask 7168
      %2445 = vst.msk [vmem:[%s412] sm:$0xff] %vm2444, %v2318
      %2446 = vst.msk [vmem:[%s412 + $0x8] sm:$0xff] %vm2444, %v2321
      %2447 = vst.msk [vmem:[%s412 + $0x10] sm:$0xff] %vm2444, %v2326
      %2448 = vst.msk [vmem:[%s412 + $0x18] sm:$0xff] %vm2444, %v2329
      %2449 = vst.msk [vmem:[%s412 + $0x20] sm:$0xff] %vm2444, %v2334
      %2450 = vst.msk [vmem:[%s412 + $0x28] sm:$0xff] %vm2444, %v2337
      %2451 = vst.msk [vmem:[%s412 + $0x30] sm:$0xff] %vm2444, %v2342
      %2452 = vst.msk [vmem:[%s412 + $0x38] sm:$0xff] %vm2444, %v2345
      %2453 = vst.msk [vmem:[%s412 + $0x40] sm:$0xff] %vm2444, %v2350
      %2454 = vst.msk [vmem:[%s412 + $0x48] sm:$0xff] %vm2444, %v2353
      %2455 = vst.msk [vmem:[%s412 + $0x50] sm:$0xff] %vm2444, %v2358
      %2456 = vst.msk [vmem:[%s412 + $0x58] sm:$0xff] %vm2444, %v2361
      %2457 = vst.msk [vmem:[%s412 + $0x60] sm:$0xff] %vm2444, %v2366
      %2458 = vst.msk [vmem:[%s412 + $0x68] sm:$0xff] %vm2444, %v2369
      %2459 = vst.msk [vmem:[%s412 + $0x70] sm:$0xff] %vm2444, %v2374
      %2460 = vst.msk [vmem:[%s412 + $0x78] sm:$0xff] %vm2444, %v2377
      %2461 = vst.msk [vmem:[%s412 + $0x80] sm:$0xff] %vm2444, %v2382
      %2462 = vst.msk [vmem:[%s412 + $0x88] sm:$0xff] %vm2444, %v2385
      %2463 = vst.msk [vmem:[%s412 + $0x90] sm:$0xff] %vm2444, %v2390
      %2464 = vst.msk [vmem:[%s412 + $0x98] sm:$0xff] %vm2444, %v2393
      %2465 = vst.msk [vmem:[%s412 + $0xa0] sm:$0xff] %vm2444, %v2398
      %2466 = vst.msk [vmem:[%s412 + $0xa8] sm:$0xff] %vm2444, %v2401
      %2467 = vst.msk [vmem:[%s412 + $0xb0] sm:$0xff] %vm2444, %v2406
      %2468 = vst.msk [vmem:[%s412 + $0xb8] sm:$0xff] %vm2444, %v2409
      %2469 = vst.msk [vmem:[%s412 + $0xc0] sm:$0xff] %vm2444, %v2414
      %2470 = vst.msk [vmem:[%s412 + $0xc8] sm:$0xff] %vm2444, %v2417
      %2471 = vst.msk [vmem:[%s412 + $0xd0] sm:$0xff] %vm2444, %v2422
      %2472 = vst.msk [vmem:[%s412 + $0xd8] sm:$0xff] %vm2444, %v2425
      %2473 = vst.msk [vmem:[%s412 + $0xe0] sm:$0xff] %vm2444, %v2430
      %2474 = vst.msk [vmem:[%s412 + $0xe8] sm:$0xff] %vm2444, %v2433
      %2475 = vst.msk [vmem:[%s412 + $0xf0] sm:$0xff] %vm2444, %v2438
      %2476 = vst.msk [vmem:[%s412 + $0xf8] sm:$0xff] %vm2444, %v2441
      %s2477 = smul.u32 32, %s24
      %p2478 = scmp.lt.s32.totalorder %s2477, 63
      %s2479 = scalar_select %p2478, %s2477, 63
      %s2480 = smul.addr %s2479, 8
      %s2481 = scalar_lea.vmem %s11, %s2480
      // Predicated region
      $region65: #{generator_forward.1} parent=63 // pred_check
        %p2482 = pneg %p283
      $region66: #{generator_forward.1} parent=63 // pred_check_branch
        %2484 = sbr.rel (%p2482) target = $region68
      $region67: #{generator_forward.1} parent=63 // pred_region
        %s2485 = smul.u32 32, %s24
      $region68: #{generator_forward.1} parent=63 // pred_fallthru
        _
    $region64: #{generator_forward.1} parent=5 // pred_fallthru
      _
    %p2486 = scmp.le.s32.totalorder 2, %s19
    // Predicated region
    $region69: #{generator_forward.1} parent=5 // pred_check
      %p2487 = pneg %p2486
    $region70: #{generator_forward.1} parent=5 // pred_check_branch
      %2489 = sbr.rel (%p2487) target = $region72
    $region71: #{generator_forward.1} parent=5 // pred_region
      %s2490 = ssub.s32 %s19, 2
      // Predicated region
      $region73: #{generator_forward.1} parent=71 // pred_check
        %p2491 = pneg %p289
      $region74: #{generator_forward.1} parent=71 // pred_check_branch
        %2493 = sbr.rel (%p2491) target = $region76
      $region75: #{generator_forward.1} parent=71 // pred_region
        %s2494 = smul.u32 32, %s25
        %p2495 = scmp.lt.s32.totalorder %s2494, 63
        %s2496 = scalar_select %p2495, %s2494, 63
        %s2497 = smul.addr %s2496, 8
        %s2498 = scalar_lea.vmem %s11, %s2497
      $region76: #{generator_forward.1} parent=71 // pred_fallthru
        _
    $region72: #{generator_forward.1} parent=5 // pred_fallthru
      _
  $region6: #{generator_forward.1} parent=0 // loop_footer
    %s23 = sadd.s32 1, %s19
  $region7: #{generator_forward.1} parent=0 // loop_footer_branch
    %18 = sbr.rel target = $region3
  $region8: #{generator_forward.1} parent=0 // loop_exit
    _

</llo_original>
